<compile_context>
chip_gen: v7x
topology: tpu7x:2x2x1
jax: 0.10.0
libtpu: 0.0.40
codegen_flags: <defaults>
</compile_context>

<pallas_src>
import functools

import jax
import jax.numpy as jnp
from jax.experimental import pallas as pl
from jax.experimental.pallas import tpu as pltpu

# ---------------------------------------------------------------------------
# Padded dimensions (all multiples of 128 on the lane axis)
# ---------------------------------------------------------------------------
DF = 512   # featureSize 510 -> 512
DH = 256   # outFeatureSize / input_dim 200 -> 256
DS = 128   # hidden 50 -> 128
DO = 128   # scalar outputs 1 -> 128 (lane-dense store, column 0 is valid)

# Packed-vector layout: (name, slot width).  All slots are 128-aligned.
# Fused-bias slots keep the biases of fused matmuls contiguous.
_VEC_LAYOUT = [
    ("b1", DH), ("g1", DH), ("be1", DH),
    ("b2", DH), ("g2", DH), ("be2", DH),
    ("b_rd1", DH + DS),        # br1 (256) ++ bd1 (128): bias of the fused feat matmul
    ("gr1", DH), ("ber1", DH),
    ("br2", DS), ("gr2", DS), ("ber2", DS),
    ("gd", DS), ("bed", DS),
    ("b_head", DO + DO),       # br3 (128) ++ bd2 (128): bias of the fused head matmul
]
_VEC_OFF = {}
_off = 0
for _name, _w in _VEC_LAYOUT:
    _VEC_OFF[_name] = (_off, _w)
    _off += _w
VEC_TOTAL = _off  # 3328

# Column offsets inside the concatenated (256, 768) weight operand WA.
_WA_COLS = {
    "w2":  (0, DH),             # feature-extractor fc2
    "rd1": (DH, DH + DS),       # [wr1 | wd1] fused: both consume `feat`
    "wr2": (2 * DH + DS, DS),   # regressor fc2
}


# ---------------------------------------------------------------------------
# Fused kernel (whole model + whole batch resident in VMEM, no grid)
# ---------------------------------------------------------------------------
def _dann_kernel(x_ref, w1_ref, wa_ref, wb_ref, v_ref, class_ref, loss_ref,
                 *, source: bool):
    eps = 1e-5
    f32 = jnp.float32
    bf16 = jnp.bfloat16
    inv_b = 1.0 / x_ref.shape[0]

    def vec(name):
        o, w = _VEC_OFF[name]
        return v_ref[:, o:o + w]                       # (1, w) f32, static slice

    def wa(name):
        o, w = _WA_COLS[name]
        return wa_ref[:, o:o + w]                      # (DH, w) bf16

    def linear(h, w, b):
        return jnp.dot(h.astype(bf16), w, preferred_element_type=f32) + b

    def bn_train(h, g, b):
        # Single-pass training-mode BatchNorm1d:
        #   mean = sum(h)/B, var = max(sum(h*h)/B - mean^2, 0)  (clamp vs. f32
        #   cancellation), y = h*scale + (beta - mean*scale), scale = rsqrt*gamma.
        s1 = jnp.sum(h, axis=0, keepdims=True)
        s2 = jnp.sum(h * h, axis=0, keepdims=True)
        mean = s1 * inv_b
        var = jnp.maximum(s2 * inv_b - mean * mean, 0.0)
        scale = jax.lax.rsqrt(var + eps) * g
        return h * scale + (b - mean * scale)

    x = x_ref[...]                                      # (B, DF) bf16

    # ---------------- FeatureExtractorMLP ----------------
    h = jnp.maximum(bn_train(linear(x, w1_ref[...], vec("b1")),
                             vec("g1"), vec("be1")), 0.0)
    # TODO(synk): Dropout2d -> identity (see header)
    feat = jnp.maximum(bn_train(linear(h, wa("w2"), vec("b2")),
                                vec("g2"), vec("be2")), 0.0)

    # Fused matmul: regressor fc1 (wr1) and discriminator dis1 (wd1) both read feat.
    rd = linear(feat, wa("rd1"), vec("b_rd1"))          # (B, 384) f32
    r_pre = rd[:, :DH]                                  # regressor fc1 pre-act
    d_pre = rd[:, DH:DH + DS]                           # discriminator dis1 pre-act

    # ---------------- RegressorMLP tail ----------------
    r = jnp.maximum(bn_train(r_pre, vec("gr1"), vec("ber1")), 0.0)
    r = jnp.maximum(bn_train(linear(r, wa("wr2"), vec("br2")),
                             vec("gr2"), vec("ber2")), 0.0)          # (B, DS)

    # -------- Discriminator (gradient reversal = identity in forward) --------
    d = jnp.maximum(d_pre, 0.0)                         # relu(dis1(x))
    d = bn_train(d, vec("gd"), vec("bed"))              # bn(...)     (B, DS)

    # Fused heads: [r | d] (B,256) @ block-diag [[wr3, 0], [0, wd2]] (256,256)
    head = linear(jnp.concatenate([r, d], axis=1), wb_ref[...], vec("b_head"))
    class_ref[...] = head[:, :DO]                       # lane-dense; col 0 valid
    z = head[:, DO:DO + 1]                              # valid domain logit col

    # BCE vs. constant label in logit space (matches PyTorch -100 log clamp)
    z_eff = -z if source else z
    softplus = jnp.maximum(z_eff, 0.0) + jnp.log1p(jnp.exp(-jnp.abs(z_eff)))
    bce = jnp.minimum(softplus, 100.0)
    loss_ref[...] = jnp.mean(bce).reshape(1, 1)


# ---------------------------------------------------------------------------
# Host wrappers
# ---------------------------------------------------------------------------
def pad_input(x):
    """One-time pad + cast of the raw (B, featureSize) f32 input to (B, DF) bf16.

    Do this once in the data pipeline (or cache it), NOT per forward call.
    """
    B, fin = x.shape
    assert fin <= DF
    return jnp.zeros((B, DF), jnp.bfloat16).at[:, :fin].set(x.astype(jnp.bfloat16))


def dann_mlp_forward(x_pad, packed_params, source=True, alpha=1.0):
    """Returns (class_output (B,1) f32, domain_loss scalar f32).

    `alpha` only affects the backward pass of ReverseLayerF, so it is unused.
    `x_pad` is the pre-padded (B, DF) bf16 input (see pad_input); BN uses the
    whole batch in a single block so batch statistics are exact.
    """
    del alpha
    w1, wa, wb, vecs = packed_params
    B, df = x_pad.shape
    assert df == DF and x_pad.dtype == jnp.bfloat16, "pad x once with pad_input()"

    # Tiny, accurate cost hint so XLA schedules/fuses around this call instead
    # of treating it as opaque heavy work.
    flops = 2 * B * (DF * DH + DH * DH + DH * (DH + DS) + DH * DS + (2 * DS) * (2 * DO))
    bytes_accessed = (B * DF * 2            # x (bf16)
                      + DF * DH * 2         # W1 (bf16)
                      + DH * (3 * DH) * 2   # WA (bf16)
                      + (2 * DS) * (2 * DO) * 2  # WB (bf16)
                      + VEC_TOTAL * 4       # packed vectors (f32)
                      + B * DO * 4 + 4)     # class out + loss
    cost = pl.CostEstimate(flops=int(flops),
                           transcendentals=int(B + 6 * DH),
                           bytes_accessed=int(bytes_accessed))

    # Explicit VMEM budget with headroom; cap at 64 MiB so the same config
    # ports to v7x without a silent cliff.
    vmem_limit = int(min(max(8 * 2**20, 2 * 2**20 + B * 24 * 1024), 64 * 2**20))

    kernel = functools.partial(_dann_kernel, source=bool(source))
    class_full, loss = pl.pallas_call(
        kernel,
        out_shape=(jax.ShapeDtypeStruct((B, DO), jnp.float32),
                   jax.ShapeDtypeStruct((1, 1), jnp.float32)),
        compiler_params=pltpu.CompilerParams(vmem_limit_bytes=vmem_limit),
        cost_estimate=cost,
    )(x_pad, w1, wa, wb, vecs)
    return class_full[:, :1], loss[0, 0]


# ---------------------------------------------------------------------------
# Parameter packing: pad to aligned shapes, cast weights to bf16, concatenate
# all small vectors into a single (1, VEC_TOTAL) operand, keep fused-matmul
# weights/biases adjacent.
# ---------------------------------------------------------------------------
def pack_params(params):
    (w1, b1, g1, be1, w2, b2, g2, be2,
     wr1, br1, gr1, ber1, wr2, br2, gr2, ber2, wr3, br3,
     wd1, bd1, gd, bed, wd2, bd2) = params

    def padw(w, rows, cols):
        out = jnp.zeros((rows, cols), jnp.float32)
        return out.at[:w.shape[0], :w.shape[1]].set(w)

    def padv(v, width, fill=0.0):
        out = jnp.full((1, width), fill, jnp.float32)
        return out.at[:, :v.shape[1]].set(v)

    W1 = padw(w1, DF, DH).astype(jnp.bfloat16)                         # (512, 256)

    # [w2 | wr1 | wd1 | wr2] — wr1/wd1 adjacent so ONE matmul consumes `feat`.
    WA = jnp.concatenate(
        [padw(w2, DH, DH), padw(wr1, DH, DH), padw(wd1, DH, DS), padw(wr2, DH, DS)],
        axis=1).astype(jnp.bfloat16)                                   # (256, 768)

    # Block-diagonal head operand: [[wr3, 0], [0, wd2]]  -> one (B,256)x(256,256) dot.
    WB = jnp.zeros((2 * DS, 2 * DO), jnp.float32)
    WB = WB.at[:DS, :DO].set(padw(wr3, DS, DO))
    WB = WB.at[DS:, DO:].set(padw(wd2, DS, DO))
    WB = WB.astype(jnp.bfloat16)                                       # (256, 256)

    vals = {
        "b1": padv(b1, DH), "g1": padv(g1, DH, 1.0), "be1": padv(be1, DH),
        "b2": padv(b2, DH), "g2": padv(g2, DH, 1.0), "be2": padv(be2, DH),
        "b_rd1": jnp.concatenate([padv(br1, DH), padv(bd1, DS)], axis=1),
        "gr1": padv(gr1, DH, 1.0), "ber1": padv(ber1, DH),
        "br2": padv(br2, DS), "gr2": padv(gr2, DS, 1.0), "ber2": padv(ber2, DS),
        "gd": padv(gd, DS, 1.0), "bed": padv(bed, DS),
        "b_head": jnp.concatenate([padv(br3, DO), padv(bd2, DO)], axis=1),
    }
    vecs = jnp.concatenate([vals[name] for name, _ in _VEC_LAYOUT], axis=1)   # (1, 3328)
    return W1, WA, WB, vecs


# ---------------------------------------------------------------------------
# Deterministic PyTorch-style parameter construction (true, unpadded shapes).
# Linear weights stored as (in, out); BatchNorm gamma=1, beta=0 as after init.
# ---------------------------------------------------------------------------
def init_params(key, feature_size=510, out_feature_size=200,
                input_dim=200, hidden_dim=50):
    def linear(key, fan_in, fan_out):
        k1, k2 = jax.random.split(key)
        bound = 1.0 / jnp.sqrt(fan_in)
        w = jax.random.uniform(k1, (fan_in, fan_out), jnp.float32, -bound, bound)
        b = jax.random.uniform(k2, (1, fan_out), jnp.float32, -bound, bound)
        return w, b

    def bn(dim):
        return jnp.ones((1, dim), jnp.float32), jnp.zeros((1, dim), jnp.float32)

    keys = jax.random.split(key, 7)
    # FeatureExtractorMLP
    w1, b1 = linear(keys[0], feature_size, out_feature_size)
    g1, be1 = bn(out_feature_size)
    w2, b2 = linear(keys[1], out_feature_size, out_feature_size)
    g2, be2 = bn(out_feature_size)
    # RegressorMLP
    wr1, br1 = linear(keys[2], out_feature_size, out_feature_size)
    gr1, ber1 = bn(out_feature_size)
    wr2, br2 = linear(keys[3], out_feature_size, 50)
    gr2, ber2 = bn(50)
    wr3, br3 = linear(keys[4], 50, 1)
    # Discriminator
    wd1, bd1 = linear(keys[5], input_dim, hidden_dim)
    gd, bed = bn(hidden_dim)
    wd2, bd2 = linear(keys[6], hidden_dim, 1)

    return [w1, b1, g1, be1, w2, b2, g2, be2,
            wr1, br1, gr1, ber1, wr2, br2, gr2, ber2, wr3, br3,
            wd1, bd1, gd, bed, wd2, bd2]


if __name__ == "__main__":
    key = jax.random.PRNGKey(0)
    k_x, k_p = jax.random.split(key)

    B, FEATURE_SIZE = 16, 510
    x = jax.random.normal(k_x, (B, FEATURE_SIZE), jnp.float32)
    params = init_params(k_p, feature_size=FEATURE_SIZE,
                         out_feature_size=200, input_dim=200, hidden_dim=50)
    packed = pack_params(params)

    # One-time data-pipeline step (not part of the per-call forward).
    x_pad = pad_input(x)

    fwd = jax.jit(dann_mlp_forward, static_argnames=("source",))
    class_out, domain_loss = fwd(x_pad, packed, source=True)
    jax.block_until_ready((class_out, domain_loss))

    assert class_out.shape == (B, 1)
    assert domain_loss.shape == ()
    assert bool(jnp.all(jnp.isfinite(class_out))) and bool(jnp.isfinite(domain_loss))
    print("KERNEL_OK")
</pallas_src>

<mosaic_0001>
module attributes {stable_mosaic.version = 11 : i64} {
  func.func @_dann_kernel(%arg0: memref<16x512xbf16, #tpu.memory_space<vmem>>, %arg1: memref<512x256xbf16, #tpu.memory_space<vmem>>, %arg2: memref<256x768xbf16, #tpu.memory_space<vmem>>, %arg3: memref<256x256xbf16, #tpu.memory_space<vmem>>, %arg4: memref<1x3328xf32, #tpu.memory_space<vmem>>, %arg5: memref<16x128xf32, #tpu.memory_space<vmem>>, %arg6: memref<1x1xf32, #tpu.memory_space<vmem>>) attributes {dimension_semantics = [], scalar_prefetch = 0 : i64, scratch_operands = 0 : i64, tpu.core_type = #tpu.core_type<tc>} {
    %c0 = arith.constant 0 : index
    %c0_0 = arith.constant 0 : index
    %0 = vector.load %arg0[%c0, %c0_0] : memref<16x512xbf16, #tpu.memory_space<vmem>>, vector<16x512xbf16>
    %c0_1 = arith.constant 0 : index
    %c0_2 = arith.constant 0 : index
    %1 = vector.load %arg1[%c0_1, %c0_2] : memref<512x256xbf16, #tpu.memory_space<vmem>>, vector<512x256xbf16>
    %c0_3 = arith.constant 0 : index
    %c0_4 = arith.constant 0 : index
    %2 = vector.load %arg4[%c0_3, %c0_4] : memref<1x3328xf32, #tpu.memory_space<vmem>>, vector<1x256xf32>
    %cst = arith.constant dense<0.000000e+00> : vector<16x256xf32>
    %3 = tpu.matmul %0, %1, %cst {dimension_numbers = #tpu.dot_dimension_numbers<[1], [0], [0], [1], [0, 0, 1, 1], [], []>} : vector<16x512xbf16>, vector<512x256xbf16>, vector<16x256xf32> -> vector<16x256xf32>
    %4 = vector.broadcast %2 : vector<1x256xf32> to vector<16x256xf32>
    %5 = arith.addf %3, %4 : vector<16x256xf32>
    %c0_5 = arith.constant 0 : index
    %c256 = arith.constant 256 : index
    %6 = vector.load %arg4[%c0_5, %c256] : memref<1x3328xf32, #tpu.memory_space<vmem>>, vector<1x256xf32>
    %c0_6 = arith.constant 0 : index
    %c512 = arith.constant 512 : index
    %7 = vector.load %arg4[%c0_6, %c512] : memref<1x3328xf32, #tpu.memory_space<vmem>>, vector<1x256xf32>
    %cst_7 = arith.constant dense<0.000000e+00> : vector<256xf32>
    %8 = vector.multi_reduction <add>, %5, %cst_7 [0] : vector<16x256xf32> to vector<256xf32>
    %9 = vector.shape_cast %8 : vector<256xf32> to vector<1x256xf32>
    %10 = arith.mulf %5, %5 : vector<16x256xf32>
    %cst_8 = arith.constant dense<0.000000e+00> : vector<256xf32>
    %11 = vector.multi_reduction <add>, %10, %cst_8 [0] : vector<16x256xf32> to vector<256xf32>
    %12 = vector.shape_cast %11 : vector<256xf32> to vector<1x256xf32>
    %cst_9 = arith.constant 6.250000e-02 : f32
    %13 = vector.broadcast %cst_9 : f32 to vector<1x256xf32>
    %14 = arith.mulf %9, %13 : vector<1x256xf32>
    %cst_10 = arith.constant 6.250000e-02 : f32
    %15 = vector.broadcast %cst_10 : f32 to vector<1x256xf32>
    %16 = arith.mulf %12, %15 : vector<1x256xf32>
    %17 = arith.mulf %14, %14 : vector<1x256xf32>
    %18 = arith.subf %16, %17 : vector<1x256xf32>
    %cst_11 = arith.constant 0.000000e+00 : f32
    %19 = vector.broadcast %cst_11 : f32 to vector<1x256xf32>
    %20 = arith.maximumf %18, %19 : vector<1x256xf32>
    %cst_12 = arith.constant 9.99999974E-6 : f32
    %21 = vector.broadcast %cst_12 : f32 to vector<1x256xf32>
    %22 = arith.addf %20, %21 : vector<1x256xf32>
    %23 = math.rsqrt %22 : vector<1x256xf32>
    %24 = arith.mulf %23, %6 : vector<1x256xf32>
    %25 = vector.broadcast %24 : vector<1x256xf32> to vector<16x256xf32>
    %26 = arith.mulf %5, %25 : vector<16x256xf32>
    %27 = arith.mulf %14, %24 : vector<1x256xf32>
    %28 = arith.subf %7, %27 : vector<1x256xf32>
    %29 = vector.broadcast %28 : vector<1x256xf32> to vector<16x256xf32>
    %30 = arith.addf %26, %29 : vector<16x256xf32>
    %cst_13 = arith.constant 0.000000e+00 : f32
    %31 = vector.broadcast %cst_13 : f32 to vector<16x256xf32>
    %32 = arith.maximumf %30, %31 : vector<16x256xf32>
    %c0_14 = arith.constant 0 : index
    %c0_15 = arith.constant 0 : index
    %33 = vector.load %arg2[%c0_14, %c0_15] : memref<256x768xbf16, #tpu.memory_space<vmem>>, vector<256x256xbf16>
    %c0_16 = arith.constant 0 : index
    %c768 = arith.constant 768 : index
    %34 = vector.load %arg4[%c0_16, %c768] : memref<1x3328xf32, #tpu.memory_space<vmem>>, vector<1x256xf32>
    %35 = arith.truncf %32 : vector<16x256xf32> to vector<16x256xbf16>
    %cst_17 = arith.constant dense<0.000000e+00> : vector<16x256xf32>
    %36 = tpu.matmul %35, %33, %cst_17 {dimension_numbers = #tpu.dot_dimension_numbers<[1], [0], [0], [1], [0, 0, 1, 1], [], []>} : vector<16x256xbf16>, vector<256x256xbf16>, vector<16x256xf32> -> vector<16x256xf32>
    %37 = vector.broadcast %34 : vector<1x256xf32> to vector<16x256xf32>
    %38 = arith.addf %36, %37 : vector<16x256xf32>
    %c0_18 = arith.constant 0 : index
    %c1024 = arith.constant 1024 : index
    %39 = vector.load %arg4[%c0_18, %c1024] : memref<1x3328xf32, #tpu.memory_space<vmem>>, vector<1x256xf32>
    %c0_19 = arith.constant 0 : index
    %c1280 = arith.constant 1280 : index
    %40 = vector.load %arg4[%c0_19, %c1280] : memref<1x3328xf32, #tpu.memory_space<vmem>>, vector<1x256xf32>
    %cst_20 = arith.constant dense<0.000000e+00> : vector<256xf32>
    %41 = vector.multi_reduction <add>, %38, %cst_20 [0] : vector<16x256xf32> to vector<256xf32>
    %42 = vector.shape_cast %41 : vector<256xf32> to vector<1x256xf32>
    %43 = arith.mulf %38, %38 : vector<16x256xf32>
    %cst_21 = arith.constant dense<0.000000e+00> : vector<256xf32>
    %44 = vector.multi_reduction <add>, %43, %cst_21 [0] : vector<16x256xf32> to vector<256xf32>
    %45 = vector.shape_cast %44 : vector<256xf32> to vector<1x256xf32>
    %cst_22 = arith.constant 6.250000e-02 : f32
    %46 = vector.broadcast %cst_22 : f32 to vector<1x256xf32>
    %47 = arith.mulf %42, %46 : vector<1x256xf32>
    %cst_23 = arith.constant 6.250000e-02 : f32
    %48 = vector.broadcast %cst_23 : f32 to vector<1x256xf32>
    %49 = arith.mulf %45, %48 : vector<1x256xf32>
    %50 = arith.mulf %47, %47 : vector<1x256xf32>
    %51 = arith.subf %49, %50 : vector<1x256xf32>
    %cst_24 = arith.constant 0.000000e+00 : f32
    %52 = vector.broadcast %cst_24 : f32 to vector<1x256xf32>
    %53 = arith.maximumf %51, %52 : vector<1x256xf32>
    %cst_25 = arith.constant 9.99999974E-6 : f32
    %54 = vector.broadcast %cst_25 : f32 to vector<1x256xf32>
    %55 = arith.addf %53, %54 : vector<1x256xf32>
    %56 = math.rsqrt %55 : vector<1x256xf32>
    %57 = arith.mulf %56, %39 : vector<1x256xf32>
    %58 = vector.broadcast %57 : vector<1x256xf32> to vector<16x256xf32>
    %59 = arith.mulf %38, %58 : vector<16x256xf32>
    %60 = arith.mulf %47, %57 : vector<1x256xf32>
    %61 = arith.subf %40, %60 : vector<1x256xf32>
    %62 = vector.broadcast %61 : vector<1x256xf32> to vector<16x256xf32>
    %63 = arith.addf %59, %62 : vector<16x256xf32>
    %cst_26 = arith.constant 0.000000e+00 : f32
    %64 = vector.broadcast %cst_26 : f32 to vector<16x256xf32>
    %65 = arith.maximumf %63, %64 : vector<16x256xf32>
    %c0_27 = arith.constant 0 : index
    %c256_28 = arith.constant 256 : index
    %66 = vector.load %arg2[%c0_27, %c256_28] : memref<256x768xbf16, #tpu.memory_space<vmem>>, vector<256x384xbf16>
    %c0_29 = arith.constant 0 : index
    %c1536 = arith.constant 1536 : index
    %67 = vector.load %arg4[%c0_29, %c1536] : memref<1x3328xf32, #tpu.memory_space<vmem>>, vector<1x384xf32>
    %68 = arith.truncf %65 : vector<16x256xf32> to vector<16x256xbf16>
    %cst_30 = arith.constant dense<0.000000e+00> : vector<16x384xf32>
    %69 = tpu.matmul %68, %66, %cst_30 {dimension_numbers = #tpu.dot_dimension_numbers<[1], [0], [0], [1], [0, 0, 1, 1], [], []>} : vector<16x256xbf16>, vector<256x384xbf16>, vector<16x384xf32> -> vector<16x384xf32>
    %70 = vector.broadcast %67 : vector<1x384xf32> to vector<16x384xf32>
    %71 = arith.addf %69, %70 : vector<16x384xf32>
    %72 = vector.extract_strided_slice %71 {offsets = [0, 0], sizes = [16, 256], strides = [1, 1]} : vector<16x384xf32> to vector<16x256xf32>
    %73 = vector.extract_strided_slice %71 {offsets = [0, 256], sizes = [16, 128], strides = [1, 1]} : vector<16x384xf32> to vector<16x128xf32>
    %c0_31 = arith.constant 0 : index
    %c1920 = arith.constant 1920 : index
    %74 = vector.load %arg4[%c0_31, %c1920] : memref<1x3328xf32, #tpu.memory_space<vmem>>, vector<1x256xf32>
    %c0_32 = arith.constant 0 : index
    %c2176 = arith.constant 2176 : index
    %75 = vector.load %arg4[%c0_32, %c2176] : memref<1x3328xf32, #tpu.memory_space<vmem>>, vector<1x256xf32>
    %cst_33 = arith.constant dense<0.000000e+00> : vector<256xf32>
    %76 = vector.multi_reduction <add>, %72, %cst_33 [0] : vector<16x256xf32> to vector<256xf32>
    %77 = vector.shape_cast %76 : vector<256xf32> to vector<1x256xf32>
    %78 = arith.mulf %72, %72 : vector<16x256xf32>
    %cst_34 = arith.constant dense<0.000000e+00> : vector<256xf32>
    %79 = vector.multi_reduction <add>, %78, %cst_34 [0] : vector<16x256xf32> to vector<256xf32>
    %80 = vector.shape_cast %79 : vector<256xf32> to vector<1x256xf32>
    %cst_35 = arith.constant 6.250000e-02 : f32
    %81 = vector.broadcast %cst_35 : f32 to vector<1x256xf32>
    %82 = arith.mulf %77, %81 : vector<1x256xf32>
    %cst_36 = arith.constant 6.250000e-02 : f32
    %83 = vector.broadcast %cst_36 : f32 to vector<1x256xf32>
    %84 = arith.mulf %80, %83 : vector<1x256xf32>
    %85 = arith.mulf %82, %82 : vector<1x256xf32>
    %86 = arith.subf %84, %85 : vector<1x256xf32>
    %cst_37 = arith.constant 0.000000e+00 : f32
    %87 = vector.broadcast %cst_37 : f32 to vector<1x256xf32>
    %88 = arith.maximumf %86, %87 : vector<1x256xf32>
    %cst_38 = arith.constant 9.99999974E-6 : f32
    %89 = vector.broadcast %cst_38 : f32 to vector<1x256xf32>
    %90 = arith.addf %88, %89 : vector<1x256xf32>
    %91 = math.rsqrt %90 : vector<1x256xf32>
    %92 = arith.mulf %91, %74 : vector<1x256xf32>
    %93 = vector.broadcast %92 : vector<1x256xf32> to vector<16x256xf32>
    %94 = arith.mulf %72, %93 : vector<16x256xf32>
    %95 = arith.mulf %82, %92 : vector<1x256xf32>
    %96 = arith.subf %75, %95 : vector<1x256xf32>
    %97 = vector.broadcast %96 : vector<1x256xf32> to vector<16x256xf32>
    %98 = arith.addf %94, %97 : vector<16x256xf32>
    %cst_39 = arith.constant 0.000000e+00 : f32
    %99 = vector.broadcast %cst_39 : f32 to vector<16x256xf32>
    %100 = arith.maximumf %98, %99 : vector<16x256xf32>
    %c0_40 = arith.constant 0 : index
    %c640 = arith.constant 640 : index
    %101 = vector.load %arg2[%c0_40, %c640] : memref<256x768xbf16, #tpu.memory_space<vmem>>, vector<256x128xbf16>
    %c0_41 = arith.constant 0 : index
    %c2432 = arith.constant 2432 : index
    %102 = vector.load %arg4[%c0_41, %c2432] : memref<1x3328xf32, #tpu.memory_space<vmem>>, vector<1x128xf32>
    %103 = arith.truncf %100 : vector<16x256xf32> to vector<16x256xbf16>
    %cst_42 = arith.constant dense<0.000000e+00> : vector<16x128xf32>
    %104 = tpu.matmul %103, %101, %cst_42 {dimension_numbers = #tpu.dot_dimension_numbers<[1], [0], [0], [1], [0, 0, 1, 1], [], []>} : vector<16x256xbf16>, vector<256x128xbf16>, vector<16x128xf32> -> vector<16x128xf32>
    %105 = vector.broadcast %102 : vector<1x128xf32> to vector<16x128xf32>
    %106 = arith.addf %104, %105 : vector<16x128xf32>
    %c0_43 = arith.constant 0 : index
    %c2560 = arith.constant 2560 : index
    %107 = vector.load %arg4[%c0_43, %c2560] : memref<1x3328xf32, #tpu.memory_space<vmem>>, vector<1x128xf32>
    %c0_44 = arith.constant 0 : index
    %c2688 = arith.constant 2688 : index
    %108 = vector.load %arg4[%c0_44, %c2688] : memref<1x3328xf32, #tpu.memory_space<vmem>>, vector<1x128xf32>
    %cst_45 = arith.constant dense<0.000000e+00> : vector<128xf32>
    %109 = vector.multi_reduction <add>, %106, %cst_45 [0] : vector<16x128xf32> to vector<128xf32>
    %110 = vector.shape_cast %109 : vector<128xf32> to vector<1x128xf32>
    %111 = arith.mulf %106, %106 : vector<16x128xf32>
    %cst_46 = arith.constant dense<0.000000e+00> : vector<128xf32>
    %112 = vector.multi_reduction <add>, %111, %cst_46 [0] : vector<16x128xf32> to vector<128xf32>
    %113 = vector.shape_cast %112 : vector<128xf32> to vector<1x128xf32>
    %cst_47 = arith.constant 6.250000e-02 : f32
    %114 = vector.broadcast %cst_47 : f32 to vector<1x128xf32>
    %115 = arith.mulf %110, %114 : vector<1x128xf32>
    %cst_48 = arith.constant 6.250000e-02 : f32
    %116 = vector.broadcast %cst_48 : f32 to vector<1x128xf32>
    %117 = arith.mulf %113, %116 : vector<1x128xf32>
    %118 = arith.mulf %115, %115 : vector<1x128xf32>
    %119 = arith.subf %117, %118 : vector<1x128xf32>
    %cst_49 = arith.constant 0.000000e+00 : f32
    %120 = vector.broadcast %cst_49 : f32 to vector<1x128xf32>
    %121 = arith.maximumf %119, %120 : vector<1x128xf32>
    %cst_50 = arith.constant 9.99999974E-6 : f32
    %122 = vector.broadcast %cst_50 : f32 to vector<1x128xf32>
    %123 = arith.addf %121, %122 : vector<1x128xf32>
    %124 = math.rsqrt %123 : vector<1x128xf32>
    %125 = arith.mulf %124, %107 : vector<1x128xf32>
    %126 = vector.broadcast %125 : vector<1x128xf32> to vector<16x128xf32>
    %127 = arith.mulf %106, %126 : vector<16x128xf32>
    %128 = arith.mulf %115, %125 : vector<1x128xf32>
    %129 = arith.subf %108, %128 : vector<1x128xf32>
    %130 = vector.broadcast %129 : vector<1x128xf32> to vector<16x128xf32>
    %131 = arith.addf %127, %130 : vector<16x128xf32>
    %cst_51 = arith.constant 0.000000e+00 : f32
    %132 = vector.broadcast %cst_51 : f32 to vector<16x128xf32>
    %133 = arith.maximumf %131, %132 : vector<16x128xf32>
    %cst_52 = arith.constant 0.000000e+00 : f32
    %134 = vector.broadcast %cst_52 : f32 to vector<16x128xf32>
    %135 = arith.maximumf %73, %134 : vector<16x128xf32>
    %c0_53 = arith.constant 0 : index
    %c2816 = arith.constant 2816 : index
    %136 = vector.load %arg4[%c0_53, %c2816] : memref<1x3328xf32, #tpu.memory_space<vmem>>, vector<1x128xf32>
    %c0_54 = arith.constant 0 : index
    %c2944 = arith.constant 2944 : index
    %137 = vector.load %arg4[%c0_54, %c2944] : memref<1x3328xf32, #tpu.memory_space<vmem>>, vector<1x128xf32>
    %cst_55 = arith.constant dense<0.000000e+00> : vector<128xf32>
    %138 = vector.multi_reduction <add>, %135, %cst_55 [0] : vector<16x128xf32> to vector<128xf32>
    %139 = vector.shape_cast %138 : vector<128xf32> to vector<1x128xf32>
    %140 = arith.mulf %135, %135 : vector<16x128xf32>
    %cst_56 = arith.constant dense<0.000000e+00> : vector<128xf32>
    %141 = vector.multi_reduction <add>, %140, %cst_56 [0] : vector<16x128xf32> to vector<128xf32>
    %142 = vector.shape_cast %141 : vector<128xf32> to vector<1x128xf32>
    %cst_57 = arith.constant 6.250000e-02 : f32
    %143 = vector.broadcast %cst_57 : f32 to vector<1x128xf32>
    %144 = arith.mulf %139, %143 : vector<1x128xf32>
    %cst_58 = arith.constant 6.250000e-02 : f32
    %145 = vector.broadcast %cst_58 : f32 to vector<1x128xf32>
    %146 = arith.mulf %142, %145 : vector<1x128xf32>
    %147 = arith.mulf %144, %144 : vector<1x128xf32>
    %148 = arith.subf %146, %147 : vector<1x128xf32>
    %cst_59 = arith.constant 0.000000e+00 : f32
    %149 = vector.broadcast %cst_59 : f32 to vector<1x128xf32>
    %150 = arith.maximumf %148, %149 : vector<1x128xf32>
    %cst_60 = arith.constant 9.99999974E-6 : f32
    %151 = vector.broadcast %cst_60 : f32 to vector<1x128xf32>
    %152 = arith.addf %150, %151 : vector<1x128xf32>
    %153 = math.rsqrt %152 : vector<1x128xf32>
    %154 = arith.mulf %153, %136 : vector<1x128xf32>
    %155 = vector.broadcast %154 : vector<1x128xf32> to vector<16x128xf32>
    %156 = arith.mulf %135, %155 : vector<16x128xf32>
    %157 = arith.mulf %144, %154 : vector<1x128xf32>
    %158 = arith.subf %137, %157 : vector<1x128xf32>
    %159 = vector.broadcast %158 : vector<1x128xf32> to vector<16x128xf32>
    %160 = arith.addf %156, %159 : vector<16x128xf32>
    %161 = tpu.concatenate %133, %160 in 1 : vector<16x128xf32>, vector<16x128xf32> -> vector<16x256xf32>
    %c0_61 = arith.constant 0 : index
    %c0_62 = arith.constant 0 : index
    %162 = vector.load %arg3[%c0_61, %c0_62] : memref<256x256xbf16, #tpu.memory_space<vmem>>, vector<256x256xbf16>
    %c0_63 = arith.constant 0 : index
    %c3072 = arith.constant 3072 : index
    %163 = vector.load %arg4[%c0_63, %c3072] : memref<1x3328xf32, #tpu.memory_space<vmem>>, vector<1x256xf32>
    %164 = arith.truncf %161 : vector<16x256xf32> to vector<16x256xbf16>
    %cst_64 = arith.constant dense<0.000000e+00> : vector<16x256xf32>
    %165 = tpu.matmul %164, %162, %cst_64 {dimension_numbers = #tpu.dot_dimension_numbers<[1], [0], [0], [1], [0, 0, 1, 1], [], []>} : vector<16x256xbf16>, vector<256x256xbf16>, vector<16x256xf32> -> vector<16x256xf32>
    %166 = vector.broadcast %163 : vector<1x256xf32> to vector<16x256xf32>
    %167 = arith.addf %165, %166 : vector<16x256xf32>
    %168 = vector.extract_strided_slice %167 {offsets = [0, 0], sizes = [16, 128], strides = [1, 1]} : vector<16x256xf32> to vector<16x128xf32>
    %c0_65 = arith.constant 0 : index
    %c0_66 = arith.constant 0 : index
    %169 = vector.load %arg5[%c0_65, %c0_66] : memref<16x128xf32, #tpu.memory_space<vmem>>, vector<16x128xf32>
    tpu.vector_store %arg5[%c0_65, %c0_66], %168 {strides = array<i32>} : memref<16x128xf32, #tpu.memory_space<vmem>>, vector<16x128xf32>,
    %170 = vector.extract_strided_slice %167 {offsets = [0, 128], sizes = [16, 1], strides = [1, 1]} : vector<16x256xf32> to vector<16x1xf32>
    %cst_67 = arith.constant 0.000000e+00 : f32
    %171 = vector.broadcast %cst_67 : f32 to vector<16x1xf32>
    %172 = arith.subf %171, %170 : vector<16x1xf32>
    %cst_68 = arith.constant 0.000000e+00 : f32
    %173 = vector.broadcast %cst_68 : f32 to vector<16x1xf32>
    %174 = arith.maximumf %172, %173 : vector<16x1xf32>
    %175 = math.absf %172 : vector<16x1xf32>
    %cst_69 = arith.constant 0.000000e+00 : f32
    %176 = vector.broadcast %cst_69 : f32 to vector<16x1xf32>
    %177 = arith.subf %176, %175 : vector<16x1xf32>
    %178 = math.exp %177 : vector<16x1xf32>
    %179 = math.log1p %178 : vector<16x1xf32>
    %180 = arith.addf %174, %179 : vector<16x1xf32>
    %cst_70 = arith.constant 1.000000e+02 : f32
    %181 = vector.broadcast %cst_70 : f32 to vector<16x1xf32>
    %182 = arith.minimumf %180, %181 : vector<16x1xf32>
    %183 = vector.shape_cast %182 : vector<16x1xf32> to vector<1x16x1xf32>
    %cst_71 = arith.constant dense<0.000000e+00> : vector<1xf32>
    %184 = vector.multi_reduction <add>, %183, %cst_71 [1, 2] : vector<1x16x1xf32> to vector<1xf32>
    %185 = vector.shape_cast %184 : vector<1xf32> to vector<1x1x1xf32>
    %186 = vector.extract %185[0, 0, 0] : f32 from vector<1x1x1xf32>
    %cst_72 = arith.constant 1.600000e+01 : f32
    %187 = arith.divf %186, %cst_72 : f32
    %188 = vector.broadcast %187 : f32 to vector<1x1xf32>
    %c0_73 = arith.constant 0 : index
    %c0_74 = arith.constant 0 : index
    %189 = vector.load %arg6[%c0_73, %c0_74] : memref<1x1xf32, #tpu.memory_space<vmem>>, vector<1x1xf32>
    tpu.vector_store %arg6[%c0_73, %c0_74], %188 {strides = array<i32>} : memref<1x1xf32, #tpu.memory_space<vmem>>, vector<1x1xf32>,
    return
  }
}

</mosaic_0001>

<llo_original>
// kernel: dann_mlp_forward.1
$region0: #{dann_mlp_forward.1}
  #allocation0 [shape = 'u32[]', space=smem, size = 0x4, offset = 0x4, fixed_abs, tag = 'smem constant byte address 0x4 - core index']
  #allocation1 [shape = 'u32[144,128]{1,0:T(1,128)}', space=vmem, size = 0x12000, scoped, tag = 'internal scratch']
  %s0 = inlined_call_operand.hbm [shape: bf16[16,512], index: 0, kind: input, shape index: {}]
  %s1 = inlined_call_operand.hbm [shape: bf16[512,256], index: 1, kind: input, shape index: {}]
  %s2 = inlined_call_operand.hbm [shape: bf16[256,768], index: 2, kind: input, shape index: {}]
  %s3 = inlined_call_operand.hbm [shape: bf16[256,256], index: 3, kind: input, shape index: {}]
  %s4 = inlined_call_operand.hbm [shape: f32[1,3328], index: 4, kind: input, shape index: {}]
  %s5 = inlined_call_operand.vmem [shape: f32[16,128], index: 5, kind: output, shape index: {0}]
  %s6 = inlined_call_operand.hbm [shape: f32[1,1], index: 6, kind: output, shape index: {1}]
  %7 = xla_tuple %s5, %s6
  %s8 = sld [smem:[#allocation0]]
  $region58: #{dann_mlp_forward.1} parent=0
    _
  %s10 = ssub.s32 1, %s8
  %s11 = scalar_select 0, %s10, %s8
  $region1: #{dann_mlp_forward.1} parent=0
    #allocation2 [shape = 'u8[16384]{0}', space=vmem, size = 0x4000, scoped, tag = 'input window, operand 0, single buffered']
    #allocation3 [shape = 's32[1]{0}', space=sflag, size = 0x4, scoped, tag = 'scoped memory for dann_mlp_forward.1']
    #allocation4 [shape = 's32[1]{0}', space=sflag, size = 0x4, scoped, tag = 'scoped memory for dann_mlp_forward.1']
    #allocation5 [shape = 'u8[262144]{0}', space=vmem, size = 0x40000, scoped, tag = 'input window, operand 1, single buffered']
    #allocation6 [shape = 's32[1]{0}', space=sflag, size = 0x4, scoped, tag = 'scoped memory for dann_mlp_forward.1']
    #allocation7 [shape = 'u8[393216]{0}', space=vmem, size = 0x60000, scoped, tag = 'input window, operand 2, single buffered']
    #allocation8 [shape = 'u8[131072]{0}', space=vmem, size = 0x20000, scoped, tag = 'input window, operand 3, single buffered']
    #allocation9 [shape = 's32[1]{0}', space=sflag, size = 0x4, scoped, tag = 'scoped memory for dann_mlp_forward.1']
    #allocation10 [shape = 'u8[13312]{0}', space=vmem, size = 0x3400, scoped, tag = 'input window, operand 4, single buffered']
    #allocation11 [shape = 'u8[512]{0}', space=vmem, size = 0x400, scoped, tag = 'output window, operand 1, single buffered']
    %12 = vsyncpa [#allocation3], 0
    %13 = vsyncpa [#allocation6], 0
    %14 = vsyncpa [#allocation9], 0
    %15 = vsyncpa [#allocation4], 0
    // Predicated region
    $region2: #{dann_mlp_forward.1} parent=1 // pred_check
      _
    $region3: #{dann_mlp_forward.1} parent=1 // pred_check_branch
      %17 = sbr.rel (0) target = $region5
    $region4: #{dann_mlp_forward.1} parent=1 // pred_region
      %s19 = ssub.s32 512, 512
      %20 = vsyncadd [#allocation3], %s19
      %s21 = sshll.u32 [#allocation2], 4
      %s22 = int_to_ptr.vmem [resolvable:$true] %s21
      %27 = dma.hbm_to_vmem [thread:$0]  %s0, 512, %s22, [#allocation3], 256, 256, 16
    $region5: #{dann_mlp_forward.1} parent=1 // pred_fallthru
      _
    // Predicated region
    $region6: #{dann_mlp_forward.1} parent=1 // pred_check
      _
    $region7: #{dann_mlp_forward.1} parent=1 // pred_check_branch
      %29 = sbr.rel (0) target = $region9
    $region8: #{dann_mlp_forward.1} parent=1 // pred_region
      %s31 = ssub.s32 8192, 8192
      %32 = vsyncadd [#allocation6], %s31
      %s33 = sshll.u32 [#allocation5], 4
      %s34 = int_to_ptr.vmem [resolvable:$true] %s33
      %39 = dma.hbm_to_vmem [thread:$0]  %s1, 8192, %s34, [#allocation6], 128, 128, 8
    $region9: #{dann_mlp_forward.1} parent=1 // pred_fallthru
      _
    // Predicated region
    $region10: #{dann_mlp_forward.1} parent=1 // pred_check
      _
    $region11: #{dann_mlp_forward.1} parent=1 // pred_check_branch
      %41 = sbr.rel (0) target = $region13
    $region12: #{dann_mlp_forward.1} parent=1 // pred_region
      %s43 = ssub.s32 12288, 12288
      %44 = vsyncadd [#allocation6], %s43
      %s45 = sshll.u32 [#allocation7], 4
      %s46 = int_to_ptr.vmem [resolvable:$true] %s45
      %51 = dma.hbm_to_vmem [thread:$0]  %s2, 12288, %s46, [#allocation6], 384, 384, 24
    $region13: #{dann_mlp_forward.1} parent=1 // pred_fallthru
      _
    // Predicated region
    $region14: #{dann_mlp_forward.1} parent=1 // pred_check
      _
    $region15: #{dann_mlp_forward.1} parent=1 // pred_check_branch
      %53 = sbr.rel (0) target = $region17
    $region16: #{dann_mlp_forward.1} parent=1 // pred_region
      %s55 = ssub.s32 4096, 4096
      %56 = vsyncadd [#allocation9], %s55
      %s57 = sshll.u32 [#allocation8], 4
      %s58 = int_to_ptr.vmem [resolvable:$true] %s57
      %63 = dma.hbm_to_vmem [thread:$0]  %s3, 4096, %s58, [#allocation9], 128, 128, 8
    $region17: #{dann_mlp_forward.1} parent=1 // pred_fallthru
      _
    // Predicated region
    $region18: #{dann_mlp_forward.1} parent=1 // pred_check
      _
    $region19: #{dann_mlp_forward.1} parent=1 // pred_check_branch
      %65 = sbr.rel (0) target = $region21
    $region20: #{dann_mlp_forward.1} parent=1 // pred_region
      %s67 = ssub.s32 416, 416
      %68 = vsyncadd [#allocation9], %s67
      %s70 = sshll.u32 [#allocation10], 4
      %s71 = int_to_ptr.vmem [resolvable:$true] %s70
      %73 = dma.hbm_to_vmem [thread:$0]  %s4, 416, %s71, [#allocation9]
    $region21: #{dann_mlp_forward.1} parent=1 // pred_fallthru
      _
    // Predicated region
    $region22: #{dann_mlp_forward.1} parent=1 // pred_check
      _
    $region23: #{dann_mlp_forward.1} parent=1 // pred_check_branch
      %75 = sbr.rel (0) target = $region25
    $region24: #{dann_mlp_forward.1} parent=1 // pred_region
      %76 = dma.done [#allocation3], 512
    $region25: #{dann_mlp_forward.1} parent=1 // pred_fallthru
      _
    // Predicated region
    $region26: #{dann_mlp_forward.1} parent=1 // pred_check
      _
    $region27: #{dann_mlp_forward.1} parent=1 // pred_check_branch
      %78 = sbr.rel (0) target = $region29
    $region28: #{dann_mlp_forward.1} parent=1 // pred_region
      %79 = dma.done [#allocation6], 8192
    $region29: #{dann_mlp_forward.1} parent=1 // pred_fallthru
      _
    // Predicated region
    $region30: #{dann_mlp_forward.1} parent=1 // pred_check
      _
    $region31: #{dann_mlp_forward.1} parent=1 // pred_check_branch
      %81 = sbr.rel (0) target = $region33
    $region32: #{dann_mlp_forward.1} parent=1 // pred_region
      %82 = dma.done [#allocation6], 12288
    $region33: #{dann_mlp_forward.1} parent=1 // pred_fallthru
      _
    // Predicated region
    $region34: #{dann_mlp_forward.1} parent=1 // pred_check
      _
    $region35: #{dann_mlp_forward.1} parent=1 // pred_check_branch
      %84 = sbr.rel (0) target = $region37
    $region36: #{dann_mlp_forward.1} parent=1 // pred_region
      %85 = dma.done [#allocation9], 4096
    $region37: #{dann_mlp_forward.1} parent=1 // pred_fallthru
      _
    // Predicated region
    $region38: #{dann_mlp_forward.1} parent=1 // pred_check
      _
    $region39: #{dann_mlp_forward.1} parent=1 // pred_check_branch
      %87 = sbr.rel (0) target = $region41
    $region40: #{dann_mlp_forward.1} parent=1 // pred_region
      %88 = dma.done [#allocation9], 416
    $region41: #{dann_mlp_forward.1} parent=1 // pred_fallthru
      _
    %v90 = vld [vmem:[#allocation2] sm:$0xff]
    %v91 = vld [vmem:[#allocation2 + $0x8] sm:$0xff]
    %v92 = vld [vmem:[#allocation2 + $0x10] sm:$0xff]
    %v93 = vld [vmem:[#allocation2 + $0x18] sm:$0xff]
    %v94 = vld [vmem:[#allocation5] sm:$0xff]
    %v95 = vld [vmem:[#allocation5 + $0x8] sm:$0xff]
    %v96 = vld [vmem:[#allocation5 + $0x10] sm:$0xff]
    %v97 = vld [vmem:[#allocation5 + $0x18] sm:$0xff]
    %v98 = vld [vmem:[#allocation5 + $0x20] sm:$0xff]
    %v99 = vld [vmem:[#allocation5 + $0x28] sm:$0xff]
    %v100 = vld [vmem:[#allocation5 + $0x30] sm:$0xff]
    %v101 = vld [vmem:[#allocation5 + $0x38] sm:$0xff]
    %v102 = vld [vmem:[#allocation5 + $0x40] sm:$0xff]
    %v103 = vld [vmem:[#allocation5 + $0x48] sm:$0xff]
    %v104 = vld [vmem:[#allocation5 + $0x50] sm:$0xff]
    %v105 = vld [vmem:[#allocation5 + $0x58] sm:$0xff]
    %v106 = vld [vmem:[#allocation5 + $0x60] sm:$0xff]
    %v107 = vld [vmem:[#allocation5 + $0x68] sm:$0xff]
    %v108 = vld [vmem:[#allocation5 + $0x70] sm:$0xff]
    %v109 = vld [vmem:[#allocation5 + $0x78] sm:$0xff]
    %v110 = vld [vmem:[#allocation5 + $0x80] sm:$0xff]
    %v111 = vld [vmem:[#allocation5 + $0x88] sm:$0xff]
    %v112 = vld [vmem:[#allocation5 + $0x90] sm:$0xff]
    %v113 = vld [vmem:[#allocation5 + $0x98] sm:$0xff]
    %v114 = vld [vmem:[#allocation5 + $0xa0] sm:$0xff]
    %v115 = vld [vmem:[#allocation5 + $0xa8] sm:$0xff]
    %v116 = vld [vmem:[#allocation5 + $0xb0] sm:$0xff]
    %v117 = vld [vmem:[#allocation5 + $0xb8] sm:$0xff]
    %v118 = vld [vmem:[#allocation5 + $0xc0] sm:$0xff]
    %v119 = vld [vmem:[#allocation5 + $0xc8] sm:$0xff]
    %v120 = vld [vmem:[#allocation5 + $0xd0] sm:$0xff]
    %v121 = vld [vmem:[#allocation5 + $0xd8] sm:$0xff]
    %v122 = vld [vmem:[#allocation5 + $0xe0] sm:$0xff]
    %v123 = vld [vmem:[#allocation5 + $0xe8] sm:$0xff]
    %v124 = vld [vmem:[#allocation5 + $0xf0] sm:$0xff]
    %v125 = vld [vmem:[#allocation5 + $0xf8] sm:$0xff]
    %v126 = vld [vmem:[#allocation5 + $0x100] sm:$0xff]
    %v127 = vld [vmem:[#allocation5 + $0x108] sm:$0xff]
    %v128 = vld [vmem:[#allocation5 + $0x110] sm:$0xff]
    %v129 = vld [vmem:[#allocation5 + $0x118] sm:$0xff]
    %v130 = vld [vmem:[#allocation5 + $0x120] sm:$0xff]
    %v131 = vld [vmem:[#allocation5 + $0x128] sm:$0xff]
    %v132 = vld [vmem:[#allocation5 + $0x130] sm:$0xff]
    %v133 = vld [vmem:[#allocation5 + $0x138] sm:$0xff]
    %v134 = vld [vmem:[#allocation5 + $0x140] sm:$0xff]
    %v135 = vld [vmem:[#allocation5 + $0x148] sm:$0xff]
    %v136 = vld [vmem:[#allocation5 + $0x150] sm:$0xff]
    %v137 = vld [vmem:[#allocation5 + $0x158] sm:$0xff]
    %v138 = vld [vmem:[#allocation5 + $0x160] sm:$0xff]
    %v139 = vld [vmem:[#allocation5 + $0x168] sm:$0xff]
    %v140 = vld [vmem:[#allocation5 + $0x170] sm:$0xff]
    %v141 = vld [vmem:[#allocation5 + $0x178] sm:$0xff]
    %v142 = vld [vmem:[#allocation5 + $0x180] sm:$0xff]
    %v143 = vld [vmem:[#allocation5 + $0x188] sm:$0xff]
    %v144 = vld [vmem:[#allocation5 + $0x190] sm:$0xff]
    %v145 = vld [vmem:[#allocation5 + $0x198] sm:$0xff]
    %v146 = vld [vmem:[#allocation5 + $0x1a0] sm:$0xff]
    %v147 = vld [vmem:[#allocation5 + $0x1a8] sm:$0xff]
    %v148 = vld [vmem:[#allocation5 + $0x1b0] sm:$0xff]
    %v149 = vld [vmem:[#allocation5 + $0x1b8] sm:$0xff]
    %v150 = vld [vmem:[#allocation5 + $0x1c0] sm:$0xff]
    %v151 = vld [vmem:[#allocation5 + $0x1c8] sm:$0xff]
    %v152 = vld [vmem:[#allocation5 + $0x1d0] sm:$0xff]
    %v153 = vld [vmem:[#allocation5 + $0x1d8] sm:$0xff]
    %v154 = vld [vmem:[#allocation5 + $0x1e0] sm:$0xff]
    %v155 = vld [vmem:[#allocation5 + $0x1e8] sm:$0xff]
    %v156 = vld [vmem:[#allocation5 + $0x1f0] sm:$0xff]
    %v157 = vld [vmem:[#allocation5 + $0x1f8] sm:$0xff]
    %v158 = vld [vmem:[#allocation10] sm:$0x3]
    %v160 = vlaneseq
    %v161 = vshrl.u32 %v160, 7
    %v162 = vsub.s32 0, %v161
    %v163 = vrot.slane %v158, %v162
    %v164 = vlaneseq
    %v165 = vshrl.u32 %v164, 7
    %v166 = vsub.s32 1, %v165
    %v167 = vrot.slane %v158, %v166
    %v174 = vunpack.c.l.b16 %v90
    %v175 = vunpack.c.h.b16 %v90
    %v176 = vunpack.c.l.b16 %v91
    %v177 = vunpack.c.h.b16 %v91
    %v178 = vunpack.c.l.b16 %v92
    %v179 = vunpack.c.h.b16 %v92
    %v180 = vunpack.c.l.b16 %v93
    %v181 = vunpack.c.h.b16 %v93
    %v182 = vpack.c.b16 %v178, %v174
    %v183 = vpack.c.b16 %v179, %v175
    %v184 = vpack.c.b16 %v180, %v176
    %v185 = vpack.c.b16 %v181, %v177
    %v254 = vunpack.c.l.b16 %v94
    %v255 = vunpack.c.h.b16 %v94
    %v256 = vunpack.c.l.b16 %v95
    %v257 = vunpack.c.h.b16 %v95
    %v258 = vunpack.c.l.b16 %v96
    %v259 = vunpack.c.h.b16 %v96
    %v260 = vunpack.c.l.b16 %v97
    %v261 = vunpack.c.h.b16 %v97
    %v262 = vunpack.c.l.b16 %v98
    %v263 = vunpack.c.h.b16 %v98
    %v264 = vunpack.c.l.b16 %v99
    %v265 = vunpack.c.h.b16 %v99
    %v266 = vunpack.c.l.b16 %v100
    %v267 = vunpack.c.h.b16 %v100
    %v268 = vunpack.c.l.b16 %v101
    %v269 = vunpack.c.h.b16 %v101
    %v270 = vunpack.c.l.b16 %v102
    %v271 = vunpack.c.h.b16 %v102
    %v272 = vunpack.c.l.b16 %v103
    %v273 = vunpack.c.h.b16 %v103
    %v274 = vunpack.c.l.b16 %v104
    %v275 = vunpack.c.h.b16 %v104
    %v276 = vunpack.c.l.b16 %v105
    %v277 = vunpack.c.h.b16 %v105
    %v278 = vunpack.c.l.b16 %v106
    %v279 = vunpack.c.h.b16 %v106
    %v280 = vunpack.c.l.b16 %v107
    %v281 = vunpack.c.h.b16 %v107
    %v282 = vunpack.c.l.b16 %v108
    %v283 = vunpack.c.h.b16 %v108
    %v284 = vunpack.c.l.b16 %v109
    %v285 = vunpack.c.h.b16 %v109
    %v286 = vunpack.c.l.b16 %v110
    %v287 = vunpack.c.h.b16 %v110
    %v288 = vunpack.c.l.b16 %v111
    %v289 = vunpack.c.h.b16 %v111
    %v290 = vunpack.c.l.b16 %v112
    %v291 = vunpack.c.h.b16 %v112
    %v292 = vunpack.c.l.b16 %v113
    %v293 = vunpack.c.h.b16 %v113
    %v294 = vunpack.c.l.b16 %v114
    %v295 = vunpack.c.h.b16 %v114
    %v296 = vunpack.c.l.b16 %v115
    %v297 = vunpack.c.h.b16 %v115
    %v298 = vunpack.c.l.b16 %v116
    %v299 = vunpack.c.h.b16 %v116
    %v300 = vunpack.c.l.b16 %v117
    %v301 = vunpack.c.h.b16 %v117
    %v302 = vunpack.c.l.b16 %v118
    %v303 = vunpack.c.h.b16 %v118
    %v304 = vunpack.c.l.b16 %v119
    %v305 = vunpack.c.h.b16 %v119
    %v306 = vunpack.c.l.b16 %v120
    %v307 = vunpack.c.h.b16 %v120
    %v308 = vunpack.c.l.b16 %v121
    %v309 = vunpack.c.h.b16 %v121
    %v310 = vunpack.c.l.b16 %v122
    %v311 = vunpack.c.h.b16 %v122
    %v312 = vunpack.c.l.b16 %v123
    %v313 = vunpack.c.h.b16 %v123
    %v314 = vunpack.c.l.b16 %v124
    %v315 = vunpack.c.h.b16 %v124
    %v316 = vunpack.c.l.b16 %v125
    %v317 = vunpack.c.h.b16 %v125
    %v318 = vunpack.c.l.b16 %v126
    %v319 = vunpack.c.h.b16 %v126
    %v320 = vunpack.c.l.b16 %v127
    %v321 = vunpack.c.h.b16 %v127
    %v322 = vunpack.c.l.b16 %v128
    %v323 = vunpack.c.h.b16 %v128
    %v324 = vunpack.c.l.b16 %v129
    %v325 = vunpack.c.h.b16 %v129
    %v326 = vunpack.c.l.b16 %v130
    %v327 = vunpack.c.h.b16 %v130
    %v328 = vunpack.c.l.b16 %v131
    %v329 = vunpack.c.h.b16 %v131
    %v330 = vunpack.c.l.b16 %v132
    %v331 = vunpack.c.h.b16 %v132
    %v332 = vunpack.c.l.b16 %v133
    %v333 = vunpack.c.h.b16 %v133
    %v334 = vunpack.c.l.b16 %v134
    %v335 = vunpack.c.h.b16 %v134
    %v336 = vunpack.c.l.b16 %v135
    %v337 = vunpack.c.h.b16 %v135
    %v338 = vunpack.c.l.b16 %v136
    %v339 = vunpack.c.h.b16 %v136
    %v340 = vunpack.c.l.b16 %v137
    %v341 = vunpack.c.h.b16 %v137
    %v342 = vunpack.c.l.b16 %v138
    %v343 = vunpack.c.h.b16 %v138
    %v344 = vunpack.c.l.b16 %v139
    %v345 = vunpack.c.h.b16 %v139
    %v346 = vunpack.c.l.b16 %v140
    %v347 = vunpack.c.h.b16 %v140
    %v348 = vunpack.c.l.b16 %v141
    %v349 = vunpack.c.h.b16 %v141
    %v350 = vunpack.c.l.b16 %v142
    %v351 = vunpack.c.h.b16 %v142
    %v352 = vunpack.c.l.b16 %v143
    %v353 = vunpack.c.h.b16 %v143
    %v354 = vunpack.c.l.b16 %v144
    %v355 = vunpack.c.h.b16 %v144
    %v356 = vunpack.c.l.b16 %v145
    %v357 = vunpack.c.h.b16 %v145
    %v358 = vunpack.c.l.b16 %v146
    %v359 = vunpack.c.h.b16 %v146
    %v360 = vunpack.c.l.b16 %v147
    %v361 = vunpack.c.h.b16 %v147
    %v362 = vunpack.c.l.b16 %v148
    %v363 = vunpack.c.h.b16 %v148
    %v364 = vunpack.c.l.b16 %v149
    %v365 = vunpack.c.h.b16 %v149
    %v366 = vunpack.c.l.b16 %v150
    %v367 = vunpack.c.h.b16 %v150
    %v368 = vunpack.c.l.b16 %v151
    %v369 = vunpack.c.h.b16 %v151
    %v370 = vunpack.c.l.b16 %v152
    %v371 = vunpack.c.h.b16 %v152
    %v372 = vunpack.c.l.b16 %v153
    %v373 = vunpack.c.h.b16 %v153
    %v374 = vunpack.c.l.b16 %v154
    %v375 = vunpack.c.h.b16 %v154
    %v376 = vunpack.c.l.b16 %v155
    %v377 = vunpack.c.h.b16 %v155
    %v378 = vunpack.c.l.b16 %v156
    %v379 = vunpack.c.h.b16 %v156
    %v380 = vunpack.c.l.b16 %v157
    %v381 = vunpack.c.h.b16 %v157
    %v382 = vpack.c.b16 %v256, %v254
    %v383 = vpack.c.b16 %v257, %v255
    %v384 = vpack.c.b16 %v260, %v258
    %v385 = vpack.c.b16 %v261, %v259
    %v386 = vpack.c.b16 %v264, %v262
    %v387 = vpack.c.b16 %v265, %v263
    %v388 = vpack.c.b16 %v268, %v266
    %v389 = vpack.c.b16 %v269, %v267
    %v390 = vpack.c.b16 %v272, %v270
    %v391 = vpack.c.b16 %v273, %v271
    %v392 = vpack.c.b16 %v276, %v274
    %v393 = vpack.c.b16 %v277, %v275
    %v394 = vpack.c.b16 %v280, %v278
    %v395 = vpack.c.b16 %v281, %v279
    %v396 = vpack.c.b16 %v284, %v282
    %v397 = vpack.c.b16 %v285, %v283
    %v398 = vpack.c.b16 %v288, %v286
    %v399 = vpack.c.b16 %v289, %v287
    %v400 = vpack.c.b16 %v292, %v290
    %v401 = vpack.c.b16 %v293, %v291
    %v402 = vpack.c.b16 %v296, %v294
    %v403 = vpack.c.b16 %v297, %v295
    %v404 = vpack.c.b16 %v300, %v298
    %v405 = vpack.c.b16 %v301, %v299
    %v406 = vpack.c.b16 %v304, %v302
    %v407 = vpack.c.b16 %v305, %v303
    %v408 = vpack.c.b16 %v308, %v306
    %v409 = vpack.c.b16 %v309, %v307
    %v410 = vpack.c.b16 %v312, %v310
    %v411 = vpack.c.b16 %v313, %v311
    %v412 = vpack.c.b16 %v316, %v314
    %v413 = vpack.c.b16 %v317, %v315
    %v414 = vpack.c.b16 %v320, %v318
    %v415 = vpack.c.b16 %v321, %v319
    %v416 = vpack.c.b16 %v324, %v322
    %v417 = vpack.c.b16 %v325, %v323
    %v418 = vpack.c.b16 %v328, %v326
    %v419 = vpack.c.b16 %v329, %v327
    %v420 = vpack.c.b16 %v332, %v330
    %v421 = vpack.c.b16 %v333, %v331
    %v422 = vpack.c.b16 %v336, %v334
    %v423 = vpack.c.b16 %v337, %v335
    %v424 = vpack.c.b16 %v340, %v338
    %v425 = vpack.c.b16 %v341, %v339
    %v426 = vpack.c.b16 %v344, %v342
    %v427 = vpack.c.b16 %v345, %v343
    %v428 = vpack.c.b16 %v348, %v346
    %v429 = vpack.c.b16 %v349, %v347
    %v430 = vpack.c.b16 %v352, %v350
    %v431 = vpack.c.b16 %v353, %v351
    %v432 = vpack.c.b16 %v356, %v354
    %v433 = vpack.c.b16 %v357, %v355
    %v434 = vpack.c.b16 %v360, %v358
    %v435 = vpack.c.b16 %v361, %v359
    %v436 = vpack.c.b16 %v364, %v362
    %v437 = vpack.c.b16 %v365, %v363
    %v438 = vpack.c.b16 %v368, %v366
    %v439 = vpack.c.b16 %v369, %v367
    %v440 = vpack.c.b16 %v372, %v370
    %v441 = vpack.c.b16 %v373, %v371
    %v442 = vpack.c.b16 %v376, %v374
    %v443 = vpack.c.b16 %v377, %v375
    %v444 = vpack.c.b16 %v380, %v378
    %v445 = vpack.c.b16 %v381, %v379
    %510 = vmatprep.subr.bf16.mxu0 %v383
    %511 = vmatpush1.bf16.msra.mxu0 %v382
    %512 = vmatprep.subr.bf16.mxu0 %v385
    %513 = vmatpush1.bf16.msra.mxu0 %v384
    %514 = vmatprep.subr.bf16.mxu0 %v387
    %515 = vmatpush1.bf16.msra.mxu0 %v386
    %516 = vmatprep.subr.bf16.mxu0 %v389
    %517 = vmatpush1.bf16.msra.mxu0 %v388
    %518 = vmatprep.subr.bf16.mxu0 %v391
    %519 = vmatpush1.bf16.msra.mxu0 %v390
    %520 = vmatprep.subr.bf16.mxu0 %v393
    %521 = vmatpush1.bf16.msra.mxu0 %v392
    %522 = vmatprep.subr.bf16.mxu0 %v395
    %523 = vmatpush1.bf16.msra.mxu0 %v394
    %524 = vmatprep.subr.bf16.mxu0 %v397
    %525 = vmatpush1.bf16.msra.mxu0 %v396
    %526 = vmatprep.subr.bf16.mxu0 %v399
    %527 = vmatpush1.bf16.msra.mxu0 %v398
    %528 = vmatprep.subr.bf16.mxu0 %v401
    %529 = vmatpush1.bf16.msra.mxu0 %v400
    %530 = vmatprep.subr.bf16.mxu0 %v403
    %531 = vmatpush1.bf16.msra.mxu0 %v402
    %532 = vmatprep.subr.bf16.mxu0 %v405
    %533 = vmatpush1.bf16.msra.mxu0 %v404
    %534 = vmatprep.subr.bf16.mxu0 %v407
    %535 = vmatpush1.bf16.msra.mxu0 %v406
    %536 = vmatprep.subr.bf16.mxu0 %v409
    %537 = vmatpush1.bf16.msra.mxu0 %v408
    %538 = vmatprep.subr.bf16.mxu0 %v411
    %539 = vmatpush1.bf16.msra.mxu0 %v410
    %540 = vmatprep.subr.bf16.mxu0 %v413
    %541 = vmatpush1.bf16.msra.mxu0 %v412
    %542 = vmatprep.mubr.bf16.mxu0 %v183
    %543 = vmatmul.mubr.bf16.gmra.mrb[0].mxu0 %v182
    %v544 = vpop.f32.mrb[0].mxu0
    %v545 = vadd.f32 %v163, %v544
    %v546 = vpop.f32.mrb[0].mxu0
    %v547 = vadd.f32 %v167, %v546
    %v548 = vpop.f32.mrb[0].mxu0
    %v549 = vadd.f32 %v163, %v548
    %v550 = vpop.f32.mrb[0].mxu0
    %v551 = vadd.f32 %v167, %v550
    %552 = vdwg.mxu0
    %553 = vmatprep.subr.bf16.mxu0 %v415
    %554 = vmatpush1.bf16.msra.mxu0 %v414
    %555 = vmatprep.subr.bf16.mxu0 %v417
    %556 = vmatpush1.bf16.msra.mxu0 %v416
    %557 = vmatprep.subr.bf16.mxu0 %v419
    %558 = vmatpush1.bf16.msra.mxu0 %v418
    %559 = vmatprep.subr.bf16.mxu0 %v421
    %560 = vmatpush1.bf16.msra.mxu0 %v420
    %561 = vmatprep.subr.bf16.mxu0 %v423
    %562 = vmatpush1.bf16.msra.mxu0 %v422
    %563 = vmatprep.subr.bf16.mxu0 %v425
    %564 = vmatpush1.bf16.msra.mxu0 %v424
    %565 = vmatprep.subr.bf16.mxu0 %v427
    %566 = vmatpush1.bf16.msra.mxu0 %v426
    %567 = vmatprep.subr.bf16.mxu0 %v429
    %568 = vmatpush1.bf16.msra.mxu0 %v428
    %569 = vmatprep.subr.bf16.mxu0 %v431
    %570 = vmatpush1.bf16.msra.mxu0 %v430
    %571 = vmatprep.subr.bf16.mxu0 %v433
    %572 = vmatpush1.bf16.msra.mxu0 %v432
    %573 = vmatprep.subr.bf16.mxu0 %v435
    %574 = vmatpush1.bf16.msra.mxu0 %v434
    %575 = vmatprep.subr.bf16.mxu0 %v437
    %576 = vmatpush1.bf16.msra.mxu0 %v436
    %577 = vmatprep.subr.bf16.mxu0 %v439
    %578 = vmatpush1.bf16.msra.mxu0 %v438
    %579 = vmatprep.subr.bf16.mxu0 %v441
    %580 = vmatpush1.bf16.msra.mxu0 %v440
    %581 = vmatprep.subr.bf16.mxu0 %v443
    %582 = vmatpush1.bf16.msra.mxu0 %v442
    %583 = vmatprep.subr.bf16.mxu0 %v445
    %584 = vmatpush1.bf16.msra.mxu0 %v444
    %585 = vmatprep.mubr.bf16.mxu0 %v185
    %586 = vmatmul.mubr.bf16.gmra.mrb[0].mxu0 %v184
    %v587 = vpop.f32.mrb[0].mxu0
    %v588 = vadd.f32 %v545, %v587
    %v589 = vpop.f32.mrb[0].mxu0
    %v590 = vadd.f32 %v547, %v589
    %v591 = vpop.f32.mrb[0].mxu0
    %v592 = vadd.f32 %v549, %v591
    %v593 = vpop.f32.mrb[0].mxu0
    %v594 = vadd.f32 %v551, %v593
    %595 = vdwg.mxu0
    %v596 = vld [vmem:[#allocation10 + $0x2] sm:$0x3]
    %v597 = vld [vmem:[#allocation10 + $0x4] sm:$0x3]
    %v598 = vadd.f32 %v588, %v592
    %v599 = vrot.slane %v598, 4
    %v600 = vadd.f32 %v598, %v599
    %v601 = vrot.slane %v600, 2
    %v602 = vadd.f32 %v600, %v601
    %v603 = vrot.slane %v602, 1
    %v604 = vadd.f32 %v602, %v603
    %v605 = vadd.f32 %v590, %v594
    %v606 = vrot.slane %v605, 4
    %v607 = vadd.f32 %v605, %v606
    %v608 = vrot.slane %v607, 2
    %v609 = vadd.f32 %v607, %v608
    %v610 = vrot.slane %v609, 1
    %v611 = vadd.f32 %v609, %v610
    %v612 = vmul.f32 %v588, %v588
    %v613 = vmul.f32 %v590, %v590
    %v614 = vmul.f32 %v592, %v592
    %v615 = vmul.f32 %v594, %v594
    %v616 = vadd.f32 %v612, %v614
    %v617 = vrot.slane %v616, 4
    %v618 = vadd.f32 %v616, %v617
    %v619 = vrot.slane %v618, 2
    %v620 = vadd.f32 %v618, %v619
    %v621 = vrot.slane %v620, 1
    %v622 = vadd.f32 %v620, %v621
    %v623 = vadd.f32 %v613, %v615
    %v624 = vrot.slane %v623, 4
    %v625 = vadd.f32 %v623, %v624
    %v626 = vrot.slane %v625, 2
    %v627 = vadd.f32 %v625, %v626
    %v628 = vrot.slane %v627, 1
    %v629 = vadd.f32 %v627, %v628
    %v630 = vmul.f32 %v604, 0.0625
    %v631 = vmul.f32 %v611, 0.0625
    %v632 = vmul.f32 %v622, 0.0625
    %v633 = vmul.f32 %v629, 0.0625
    %v634 = vmul.f32 %v630, %v630
    %v635 = vmul.f32 %v631, %v631
    %v636 = vsub.f32 %v632, %v634
    %v637 = vsub.f32 %v633, %v635
    %v638 = vmax.f32 %v636, 0.0
    %v639 = vmax.f32 %v637, 0.0
    %v640 = vadd.f32 %v638, 1e-05
    %v641 = vadd.f32 %v639, 1e-05
    %v642 = vrsqrt.pop %v640
    %v643 = vrsqrt.pop %v641
    %v645 = vlaneseq
    %v646 = vshrl.u32 %v645, 7
    %v647 = vsub.s32 0, %v646
    %v648 = vrot.slane %v596, %v647
    %v649 = vlaneseq
    %v650 = vshrl.u32 %v649, 7
    %v651 = vsub.s32 1, %v650
    %v652 = vrot.slane %v596, %v651
    %v655 = vmul.f32 %v642, %v648
    %v656 = vmul.f32 %v643, %v652
    %v657 = vlaneseq
    %v658 = vshrl.u32 %v657, 7
    %v659 = vsub.s32 0, %v658
    %v660 = vrot.slane %v655, %v659
    %v661 = vlaneseq
    %v662 = vshrl.u32 %v661, 7
    %v663 = vsub.s32 0, %v662
    %v664 = vrot.slane %v656, %v663
    %v665 = vmul.f32 %v588, %v660
    %v666 = vmul.f32 %v590, %v664
    %v667 = vmul.f32 %v592, %v660
    %v668 = vmul.f32 %v594, %v664
    %v669 = vmul.f32 %v630, %v655
    %v670 = vmul.f32 %v631, %v656
    %v673 = vcombine.low %v669, %v670
    %v675 = vunpack.c.l.s4 1966171168
    %v676 = vunpack.c.0.s8 %v675
    %v677 = vlaneseq
    %v678 = vshrl.u32 %v677, 7
    %v679 = vsub.s32 %v676, %v678
    %v680 = vrot.slane %v673, %v679
    %v682 = vunpack.c.l.s4 1966171168
    %v683 = vunpack.c.0.s8 %v682
    %v684 = vlaneseq
    %v685 = vshrl.u32 %v684, 7
    %v686 = vsub.s32 %v683, %v685
    %v687 = vrot.slane %v680, %v686
    %v689 = vsub.f32 %v597, %v687
    %v691 = vlaneseq
    %v692 = vshrl.u32 %v691, 7
    %v693 = vsub.s32 0, %v692
    %v694 = vrot.slane %v689, %v693
    %v695 = vlaneseq
    %v696 = vshrl.u32 %v695, 7
    %v697 = vsub.s32 1, %v696
    %v698 = vrot.slane %v689, %v697
    %v701 = vadd.f32 %v665, %v694
    %v702 = vadd.f32 %v666, %v698
    %v703 = vadd.f32 %v667, %v694
    %v704 = vadd.f32 %v668, %v698
    %v705 = vmax.f32 %v701, 0.0
    %v706 = vmax.f32 %v702, 0.0
    %v707 = vmax.f32 %v703, 0.0
    %v708 = vmax.f32 %v704, 0.0
    %v709 = vld [vmem:[#allocation7] sm:$0xff]
    %v710 = vld [vmem:[#allocation7 + $0x18] sm:$0xff]
    %v711 = vld [vmem:[#allocation7 + $0x30] sm:$0xff]
    %v712 = vld [vmem:[#allocation7 + $0x48] sm:$0xff]
    %v713 = vld [vmem:[#allocation7 + $0x60] sm:$0xff]
    %v714 = vld [vmem:[#allocation7 + $0x78] sm:$0xff]
    %v715 = vld [vmem:[#allocation7 + $0x90] sm:$0xff]
    %v716 = vld [vmem:[#allocation7 + $0xa8] sm:$0xff]
    %v717 = vld [vmem:[#allocation7 + $0xc0] sm:$0xff]
    %v718 = vld [vmem:[#allocation7 + $0xd8] sm:$0xff]
    %v719 = vld [vmem:[#allocation7 + $0xf0] sm:$0xff]
    %v720 = vld [vmem:[#allocation7 + $0x108] sm:$0xff]
    %v721 = vld [vmem:[#allocation7 + $0x120] sm:$0xff]
    %v722 = vld [vmem:[#allocation7 + $0x138] sm:$0xff]
    %v723 = vld [vmem:[#allocation7 + $0x150] sm:$0xff]
    %v724 = vld [vmem:[#allocation7 + $0x168] sm:$0xff]
    %v725 = vld [vmem:[#allocation7 + $0x180] sm:$0xff]
    %v726 = vld [vmem:[#allocation7 + $0x198] sm:$0xff]
    %v727 = vld [vmem:[#allocation7 + $0x1b0] sm:$0xff]
    %v728 = vld [vmem:[#allocation7 + $0x1c8] sm:$0xff]
    %v729 = vld [vmem:[#allocation7 + $0x1e0] sm:$0xff]
    %v730 = vld [vmem:[#allocation7 + $0x1f8] sm:$0xff]
    %v731 = vld [vmem:[#allocation7 + $0x210] sm:$0xff]
    %v732 = vld [vmem:[#allocation7 + $0x228] sm:$0xff]
    %v733 = vld [vmem:[#allocation7 + $0x240] sm:$0xff]
    %v734 = vld [vmem:[#allocation7 + $0x258] sm:$0xff]
    %v735 = vld [vmem:[#allocation7 + $0x270] sm:$0xff]
    %v736 = vld [vmem:[#allocation7 + $0x288] sm:$0xff]
    %v737 = vld [vmem:[#allocation7 + $0x2a0] sm:$0xff]
    %v738 = vld [vmem:[#allocation7 + $0x2b8] sm:$0xff]
    %v739 = vld [vmem:[#allocation7 + $0x2d0] sm:$0xff]
    %v740 = vld [vmem:[#allocation7 + $0x2e8] sm:$0xff]
    %v741 = vld [vmem:[#allocation10 + $0x6] sm:$0x3]
    %v742 = vpack.c.bf16 %v707, %v705
    %v743 = vpack.c.bf16 %v708, %v706
    %v745 = vlaneseq
    %v746 = vshrl.u32 %v745, 7
    %v747 = vsub.s32 0, %v746
    %v748 = vrot.slane %v741, %v747
    %v749 = vlaneseq
    %v750 = vshrl.u32 %v749, 7
    %v751 = vsub.s32 1, %v750
    %v752 = vrot.slane %v741, %v751
    %v787 = vunpack.c.l.b16 %v709
    %v788 = vunpack.c.h.b16 %v709
    %v789 = vunpack.c.l.b16 %v710
    %v790 = vunpack.c.h.b16 %v710
    %v791 = vunpack.c.l.b16 %v711
    %v792 = vunpack.c.h.b16 %v711
    %v793 = vunpack.c.l.b16 %v712
    %v794 = vunpack.c.h.b16 %v712
    %v795 = vunpack.c.l.b16 %v713
    %v796 = vunpack.c.h.b16 %v713
    %v797 = vunpack.c.l.b16 %v714
    %v798 = vunpack.c.h.b16 %v714
    %v799 = vunpack.c.l.b16 %v715
    %v800 = vunpack.c.h.b16 %v715
    %v801 = vunpack.c.l.b16 %v716
    %v802 = vunpack.c.h.b16 %v716
    %v803 = vunpack.c.l.b16 %v717
    %v804 = vunpack.c.h.b16 %v717
    %v805 = vunpack.c.l.b16 %v718
    %v806 = vunpack.c.h.b16 %v718
    %v807 = vunpack.c.l.b16 %v719
    %v808 = vunpack.c.h.b16 %v719
    %v809 = vunpack.c.l.b16 %v720
    %v810 = vunpack.c.h.b16 %v720
    %v811 = vunpack.c.l.b16 %v721
    %v812 = vunpack.c.h.b16 %v721
    %v813 = vunpack.c.l.b16 %v722
    %v814 = vunpack.c.h.b16 %v722
    %v815 = vunpack.c.l.b16 %v723
    %v816 = vunpack.c.h.b16 %v723
    %v817 = vunpack.c.l.b16 %v724
    %v818 = vunpack.c.h.b16 %v724
    %v819 = vunpack.c.l.b16 %v725
    %v820 = vunpack.c.h.b16 %v725
    %v821 = vunpack.c.l.b16 %v726
    %v822 = vunpack.c.h.b16 %v726
    %v823 = vunpack.c.l.b16 %v727
    %v824 = vunpack.c.h.b16 %v727
    %v825 = vunpack.c.l.b16 %v728
    %v826 = vunpack.c.h.b16 %v728
    %v827 = vunpack.c.l.b16 %v729
    %v828 = vunpack.c.h.b16 %v729
    %v829 = vunpack.c.l.b16 %v730
    %v830 = vunpack.c.h.b16 %v730
    %v831 = vunpack.c.l.b16 %v731
    %v832 = vunpack.c.h.b16 %v731
    %v833 = vunpack.c.l.b16 %v732
    %v834 = vunpack.c.h.b16 %v732
    %v835 = vunpack.c.l.b16 %v733
    %v836 = vunpack.c.h.b16 %v733
    %v837 = vunpack.c.l.b16 %v734
    %v838 = vunpack.c.h.b16 %v734
    %v839 = vunpack.c.l.b16 %v735
    %v840 = vunpack.c.h.b16 %v735
    %v841 = vunpack.c.l.b16 %v736
    %v842 = vunpack.c.h.b16 %v736
    %v843 = vunpack.c.l.b16 %v737
    %v844 = vunpack.c.h.b16 %v737
    %v845 = vunpack.c.l.b16 %v738
    %v846 = vunpack.c.h.b16 %v738
    %v847 = vunpack.c.l.b16 %v739
    %v848 = vunpack.c.h.b16 %v739
    %v849 = vunpack.c.l.b16 %v740
    %v850 = vunpack.c.h.b16 %v740
    %v851 = vpack.c.b16 %v789, %v787
    %v852 = vpack.c.b16 %v790, %v788
    %v853 = vpack.c.b16 %v793, %v791
    %v854 = vpack.c.b16 %v794, %v792
    %v855 = vpack.c.b16 %v797, %v795
    %v856 = vpack.c.b16 %v798, %v796
    %v857 = vpack.c.b16 %v801, %v799
    %v858 = vpack.c.b16 %v802, %v800
    %v859 = vpack.c.b16 %v805, %v803
    %v860 = vpack.c.b16 %v806, %v804
    %v861 = vpack.c.b16 %v809, %v807
    %v862 = vpack.c.b16 %v810, %v808
    %v863 = vpack.c.b16 %v813, %v811
    %v864 = vpack.c.b16 %v814, %v812
    %v865 = vpack.c.b16 %v817, %v815
    %v866 = vpack.c.b16 %v818, %v816
    %v867 = vpack.c.b16 %v821, %v819
    %v868 = vpack.c.b16 %v822, %v820
    %v869 = vpack.c.b16 %v825, %v823
    %v870 = vpack.c.b16 %v826, %v824
    %v871 = vpack.c.b16 %v829, %v827
    %v872 = vpack.c.b16 %v830, %v828
    %v873 = vpack.c.b16 %v833, %v831
    %v874 = vpack.c.b16 %v834, %v832
    %v875 = vpack.c.b16 %v837, %v835
    %v876 = vpack.c.b16 %v838, %v836
    %v877 = vpack.c.b16 %v841, %v839
    %v878 = vpack.c.b16 %v842, %v840
    %v879 = vpack.c.b16 %v845, %v843
    %v880 = vpack.c.b16 %v846, %v844
    %v881 = vpack.c.b16 %v849, %v847
    %v882 = vpack.c.b16 %v850, %v848
    %915 = vmatprep.subr.bf16.mxu0 %v852
    %916 = vmatpush1.bf16.msra.mxu0 %v851
    %917 = vmatprep.subr.bf16.mxu0 %v854
    %918 = vmatpush1.bf16.msra.mxu0 %v853
    %919 = vmatprep.subr.bf16.mxu0 %v856
    %920 = vmatpush1.bf16.msra.mxu0 %v855
    %921 = vmatprep.subr.bf16.mxu0 %v858
    %922 = vmatpush1.bf16.msra.mxu0 %v857
    %923 = vmatprep.subr.bf16.mxu0 %v860
    %924 = vmatpush1.bf16.msra.mxu0 %v859
    %925 = vmatprep.subr.bf16.mxu0 %v862
    %926 = vmatpush1.bf16.msra.mxu0 %v861
    %927 = vmatprep.subr.bf16.mxu0 %v864
    %928 = vmatpush1.bf16.msra.mxu0 %v863
    %929 = vmatprep.subr.bf16.mxu0 %v866
    %930 = vmatpush1.bf16.msra.mxu0 %v865
    %931 = vmatprep.subr.bf16.mxu0 %v868
    %932 = vmatpush1.bf16.msra.mxu0 %v867
    %933 = vmatprep.subr.bf16.mxu0 %v870
    %934 = vmatpush1.bf16.msra.mxu0 %v869
    %935 = vmatprep.subr.bf16.mxu0 %v872
    %936 = vmatpush1.bf16.msra.mxu0 %v871
    %937 = vmatprep.subr.bf16.mxu0 %v874
    %938 = vmatpush1.bf16.msra.mxu0 %v873
    %939 = vmatprep.subr.bf16.mxu0 %v876
    %940 = vmatpush1.bf16.msra.mxu0 %v875
    %941 = vmatprep.subr.bf16.mxu0 %v878
    %942 = vmatpush1.bf16.msra.mxu0 %v877
    %943 = vmatprep.subr.bf16.mxu0 %v880
    %944 = vmatpush1.bf16.msra.mxu0 %v879
    %945 = vmatprep.subr.bf16.mxu0 %v882
    %946 = vmatpush1.bf16.msra.mxu0 %v881
    %947 = vmatprep.mubr.bf16.mxu0 %v743
    %948 = vmatmul.mubr.bf16.gmra.mrb[0].mxu0 %v742
    %v949 = vpop.f32.mrb[0].mxu0
    %v950 = vadd.f32 %v748, %v949
    %v951 = vpop.f32.mrb[0].mxu0
    %v952 = vadd.f32 %v752, %v951
    %v953 = vpop.f32.mrb[0].mxu0
    %v954 = vadd.f32 %v748, %v953
    %v955 = vpop.f32.mrb[0].mxu0
    %v956 = vadd.f32 %v752, %v955
    %957 = vdwg.mxu0
    %v958 = vld [vmem:[#allocation10 + $0x8] sm:$0x3]
    %v959 = vld [vmem:[#allocation10 + $0xa] sm:$0x3]
    %v960 = vadd.f32 %v950, %v954
    %v961 = vrot.slane %v960, 4
    %v962 = vadd.f32 %v960, %v961
    %v963 = vrot.slane %v962, 2
    %v964 = vadd.f32 %v962, %v963
    %v965 = vrot.slane %v964, 1
    %v966 = vadd.f32 %v964, %v965
    %v967 = vadd.f32 %v952, %v956
    %v968 = vrot.slane %v967, 4
    %v969 = vadd.f32 %v967, %v968
    %v970 = vrot.slane %v969, 2
    %v971 = vadd.f32 %v969, %v970
    %v972 = vrot.slane %v971, 1
    %v973 = vadd.f32 %v971, %v972
    %v974 = vmul.f32 %v950, %v950
    %v975 = vmul.f32 %v952, %v952
    %v976 = vmul.f32 %v954, %v954
    %v977 = vmul.f32 %v956, %v956
    %v978 = vadd.f32 %v974, %v976
    %v979 = vrot.slane %v978, 4
    %v980 = vadd.f32 %v978, %v979
    %v981 = vrot.slane %v980, 2
    %v982 = vadd.f32 %v980, %v981
    %v983 = vrot.slane %v982, 1
    %v984 = vadd.f32 %v982, %v983
    %v985 = vadd.f32 %v975, %v977
    %v986 = vrot.slane %v985, 4
    %v987 = vadd.f32 %v985, %v986
    %v988 = vrot.slane %v987, 2
    %v989 = vadd.f32 %v987, %v988
    %v990 = vrot.slane %v989, 1
    %v991 = vadd.f32 %v989, %v990
    %v992 = vmul.f32 %v966, 0.0625
    %v993 = vmul.f32 %v973, 0.0625
    %v994 = vmul.f32 %v984, 0.0625
    %v995 = vmul.f32 %v991, 0.0625
    %v996 = vmul.f32 %v992, %v992
    %v997 = vmul.f32 %v993, %v993
    %v998 = vsub.f32 %v994, %v996
    %v999 = vsub.f32 %v995, %v997
    %v1000 = vmax.f32 %v998, 0.0
    %v1001 = vmax.f32 %v999, 0.0
    %v1002 = vadd.f32 %v1000, 1e-05
    %v1003 = vadd.f32 %v1001, 1e-05
    %v1004 = vrsqrt.pop %v1002
    %v1005 = vrsqrt.pop %v1003
    %v1007 = vlaneseq
    %v1008 = vshrl.u32 %v1007, 7
    %v1009 = vsub.s32 0, %v1008
    %v1010 = vrot.slane %v958, %v1009
    %v1011 = vlaneseq
    %v1012 = vshrl.u32 %v1011, 7
    %v1013 = vsub.s32 1, %v1012
    %v1014 = vrot.slane %v958, %v1013
    %v1017 = vmul.f32 %v1004, %v1010
    %v1018 = vmul.f32 %v1005, %v1014
    %v1019 = vlaneseq
    %v1020 = vshrl.u32 %v1019, 7
    %v1021 = vsub.s32 0, %v1020
    %v1022 = vrot.slane %v1017, %v1021
    %v1023 = vlaneseq
    %v1024 = vshrl.u32 %v1023, 7
    %v1025 = vsub.s32 0, %v1024
    %v1026 = vrot.slane %v1018, %v1025
    %v1027 = vmul.f32 %v950, %v1022
    %v1028 = vmul.f32 %v952, %v1026
    %v1029 = vmul.f32 %v954, %v1022
    %v1030 = vmul.f32 %v956, %v1026
    %v1031 = vmul.f32 %v992, %v1017
    %v1032 = vmul.f32 %v993, %v1018
    %v1035 = vcombine.low %v1031, %v1032
    %v1037 = vunpack.c.l.s4 1966171168
    %v1038 = vunpack.c.0.s8 %v1037
    %v1039 = vlaneseq
    %v1040 = vshrl.u32 %v1039, 7
    %v1041 = vsub.s32 %v1038, %v1040
    %v1042 = vrot.slane %v1035, %v1041
    %v1044 = vunpack.c.l.s4 1966171168
    %v1045 = vunpack.c.0.s8 %v1044
    %v1046 = vlaneseq
    %v1047 = vshrl.u32 %v1046, 7
    %v1048 = vsub.s32 %v1045, %v1047
    %v1049 = vrot.slane %v1042, %v1048
    %v1051 = vsub.f32 %v959, %v1049
    %v1053 = vlaneseq
    %v1054 = vshrl.u32 %v1053, 7
    %v1055 = vsub.s32 0, %v1054
    %v1056 = vrot.slane %v1051, %v1055
    %v1057 = vlaneseq
    %v1058 = vshrl.u32 %v1057, 7
    %v1059 = vsub.s32 1, %v1058
    %v1060 = vrot.slane %v1051, %v1059
    %v1063 = vadd.f32 %v1027, %v1056
    %v1064 = vadd.f32 %v1028, %v1060
    %v1065 = vadd.f32 %v1029, %v1056
    %v1066 = vadd.f32 %v1030, %v1060
    %v1067 = vmax.f32 %v1063, 0.0
    %v1068 = vmax.f32 %v1064, 0.0
    %v1069 = vmax.f32 %v1065, 0.0
    %v1070 = vmax.f32 %v1066, 0.0
    %v1071 = vld [vmem:[#allocation7 + $0x8] sm:$0xff]
    %v1072 = vld [vmem:[#allocation7 + $0x10] sm:$0xf]
    %v1073 = vld [vmem:[#allocation7 + $0x20] sm:$0xff]
    %v1074 = vld [vmem:[#allocation7 + $0x28] sm:$0xf]
    %v1075 = vld [vmem:[#allocation7 + $0x38] sm:$0xff]
    %v1076 = vld [vmem:[#allocation7 + $0x40] sm:$0xf]
    %v1077 = vld [vmem:[#allocation7 + $0x50] sm:$0xff]
    %v1078 = vld [vmem:[#allocation7 + $0x58] sm:$0xf]
    %v1079 = vld [vmem:[#allocation7 + $0x68] sm:$0xff]
    %v1080 = vld [vmem:[#allocation7 + $0x70] sm:$0xf]
    %v1081 = vld [vmem:[#allocation7 + $0x80] sm:$0xff]
    %v1082 = vld [vmem:[#allocation7 + $0x88] sm:$0xf]
    %v1083 = vld [vmem:[#allocation7 + $0x98] sm:$0xff]
    %v1084 = vld [vmem:[#allocation7 + $0xa0] sm:$0xf]
    %v1085 = vld [vmem:[#allocation7 + $0xb0] sm:$0xff]
    %v1086 = vld [vmem:[#allocation7 + $0xb8] sm:$0xf]
    %v1087 = vld [vmem:[#allocation7 + $0xc8] sm:$0xff]
    %v1088 = vld [vmem:[#allocation7 + $0xd0] sm:$0xf]
    %v1089 = vld [vmem:[#allocation7 + $0xe0] sm:$0xff]
    %v1090 = vld [vmem:[#allocation7 + $0xe8] sm:$0xf]
    %v1091 = vld [vmem:[#allocation7 + $0xf8] sm:$0xff]
    %v1092 = vld [vmem:[#allocation7 + $0x100] sm:$0xf]
    %v1093 = vld [vmem:[#allocation7 + $0x110] sm:$0xff]
    %v1094 = vld [vmem:[#allocation7 + $0x118] sm:$0xf]
    %v1095 = vld [vmem:[#allocation7 + $0x128] sm:$0xff]
    %v1096 = vld [vmem:[#allocation7 + $0x130] sm:$0xf]
    %v1097 = vld [vmem:[#allocation7 + $0x140] sm:$0xff]
    %v1098 = vld [vmem:[#allocation7 + $0x148] sm:$0xf]
    %v1099 = vld [vmem:[#allocation7 + $0x158] sm:$0xff]
    %v1100 = vld [vmem:[#allocation7 + $0x160] sm:$0xf]
    %v1101 = vld [vmem:[#allocation7 + $0x170] sm:$0xff]
    %v1102 = vld [vmem:[#allocation7 + $0x178] sm:$0xf]
    %v1103 = vld [vmem:[#allocation7 + $0x188] sm:$0xff]
    %v1104 = vld [vmem:[#allocation7 + $0x190] sm:$0xf]
    %v1105 = vld [vmem:[#allocation7 + $0x1a0] sm:$0xff]
    %v1106 = vld [vmem:[#allocation7 + $0x1a8] sm:$0xf]
    %v1107 = vld [vmem:[#allocation7 + $0x1b8] sm:$0xff]
    %v1108 = vld [vmem:[#allocation7 + $0x1c0] sm:$0xf]
    %v1109 = vld [vmem:[#allocation7 + $0x1d0] sm:$0xff]
    %v1110 = vld [vmem:[#allocation7 + $0x1d8] sm:$0xf]
    %v1111 = vld [vmem:[#allocation7 + $0x1e8] sm:$0xff]
    %v1112 = vld [vmem:[#allocation7 + $0x1f0] sm:$0xf]
    %v1113 = vld [vmem:[#allocation7 + $0x200] sm:$0xff]
    %v1114 = vld [vmem:[#allocation7 + $0x208] sm:$0xf]
    %v1115 = vld [vmem:[#allocation7 + $0x218] sm:$0xff]
    %v1116 = vld [vmem:[#allocation7 + $0x220] sm:$0xf]
    %v1117 = vld [vmem:[#allocation7 + $0x230] sm:$0xff]
    %v1118 = vld [vmem:[#allocation7 + $0x238] sm:$0xf]
    %v1119 = vld [vmem:[#allocation7 + $0x248] sm:$0xff]
    %v1120 = vld [vmem:[#allocation7 + $0x250] sm:$0xf]
    %v1121 = vld [vmem:[#allocation7 + $0x260] sm:$0xff]
    %v1122 = vld [vmem:[#allocation7 + $0x268] sm:$0xf]
    %v1123 = vld [vmem:[#allocation7 + $0x278] sm:$0xff]
    %v1124 = vld [vmem:[#allocation7 + $0x280] sm:$0xf]
    %v1125 = vld [vmem:[#allocation7 + $0x290] sm:$0xff]
    %v1126 = vld [vmem:[#allocation7 + $0x298] sm:$0xf]
    %v1127 = vld [vmem:[#allocation7 + $0x2a8] sm:$0xff]
    %v1128 = vld [vmem:[#allocation7 + $0x2b0] sm:$0xf]
    %v1129 = vld [vmem:[#allocation7 + $0x2c0] sm:$0xff]
    %v1130 = vld [vmem:[#allocation7 + $0x2c8] sm:$0xf]
    %v1131 = vld [vmem:[#allocation7 + $0x2d8] sm:$0xff]
    %v1132 = vld [vmem:[#allocation7 + $0x2e0] sm:$0xf]
    %v1133 = vld [vmem:[#allocation7 + $0x2f0] sm:$0xff]
    %v1134 = vld [vmem:[#allocation7 + $0x2f8] sm:$0xf]
    %v1135 = vld [vmem:[#allocation10 + $0xc] sm:$0x7]
    %v1136 = vpack.c.bf16 %v1069, %v1067
    %v1137 = vpack.c.bf16 %v1070, %v1068
    %v1139 = vlaneseq
    %v1140 = vshrl.u32 %v1139, 7
    %v1141 = vsub.s32 0, %v1140
    %v1142 = vrot.slane %v1135, %v1141
    %v1143 = vlaneseq
    %v1144 = vshrl.u32 %v1143, 7
    %v1145 = vsub.s32 1, %v1144
    %v1146 = vrot.slane %v1135, %v1145
    %v1147 = vlaneseq
    %v1148 = vshrl.u32 %v1147, 7
    %v1149 = vsub.s32 2, %v1148
    %v1150 = vrot.slane %v1135, %v1149
    %v1218 = vunpack.c.l.b16 %v1071
    %v1219 = vunpack.c.h.b16 %v1071
    %v1220 = vunpack.c.l.b16 %v1072
    %v1221 = vunpack.c.l.b16 %v1073
    %v1222 = vunpack.c.h.b16 %v1073
    %v1223 = vunpack.c.l.b16 %v1074
    %v1224 = vunpack.c.l.b16 %v1075
    %v1225 = vunpack.c.h.b16 %v1075
    %v1226 = vunpack.c.l.b16 %v1076
    %v1227 = vunpack.c.l.b16 %v1077
    %v1228 = vunpack.c.h.b16 %v1077
    %v1229 = vunpack.c.l.b16 %v1078
    %v1230 = vunpack.c.l.b16 %v1079
    %v1231 = vunpack.c.h.b16 %v1079
    %v1232 = vunpack.c.l.b16 %v1080
    %v1233 = vunpack.c.l.b16 %v1081
    %v1234 = vunpack.c.h.b16 %v1081
    %v1235 = vunpack.c.l.b16 %v1082
    %v1236 = vunpack.c.l.b16 %v1083
    %v1237 = vunpack.c.h.b16 %v1083
    %v1238 = vunpack.c.l.b16 %v1084
    %v1239 = vunpack.c.l.b16 %v1085
    %v1240 = vunpack.c.h.b16 %v1085
    %v1241 = vunpack.c.l.b16 %v1086
    %v1242 = vunpack.c.l.b16 %v1087
    %v1243 = vunpack.c.h.b16 %v1087
    %v1244 = vunpack.c.l.b16 %v1088
    %v1245 = vunpack.c.l.b16 %v1089
    %v1246 = vunpack.c.h.b16 %v1089
    %v1247 = vunpack.c.l.b16 %v1090
    %v1248 = vunpack.c.l.b16 %v1091
    %v1249 = vunpack.c.h.b16 %v1091
    %v1250 = vunpack.c.l.b16 %v1092
    %v1251 = vunpack.c.l.b16 %v1093
    %v1252 = vunpack.c.h.b16 %v1093
    %v1253 = vunpack.c.l.b16 %v1094
    %v1254 = vunpack.c.l.b16 %v1095
    %v1255 = vunpack.c.h.b16 %v1095
    %v1256 = vunpack.c.l.b16 %v1096
    %v1257 = vunpack.c.l.b16 %v1097
    %v1258 = vunpack.c.h.b16 %v1097
    %v1259 = vunpack.c.l.b16 %v1098
    %v1260 = vunpack.c.l.b16 %v1099
    %v1261 = vunpack.c.h.b16 %v1099
    %v1262 = vunpack.c.l.b16 %v1100
    %v1263 = vunpack.c.l.b16 %v1101
    %v1264 = vunpack.c.h.b16 %v1101
    %v1265 = vunpack.c.l.b16 %v1102
    %v1266 = vunpack.c.l.b16 %v1103
    %v1267 = vunpack.c.h.b16 %v1103
    %v1268 = vunpack.c.l.b16 %v1104
    %v1269 = vunpack.c.l.b16 %v1105
    %v1270 = vunpack.c.h.b16 %v1105
    %v1271 = vunpack.c.l.b16 %v1106
    %v1272 = vunpack.c.l.b16 %v1107
    %v1273 = vunpack.c.h.b16 %v1107
    %v1274 = vunpack.c.l.b16 %v1108
    %v1275 = vunpack.c.l.b16 %v1109
    %v1276 = vunpack.c.h.b16 %v1109
    %v1277 = vunpack.c.l.b16 %v1110
    %v1278 = vunpack.c.l.b16 %v1111
    %v1279 = vunpack.c.h.b16 %v1111
    %v1280 = vunpack.c.l.b16 %v1112
    %v1281 = vunpack.c.l.b16 %v1113
    %v1282 = vunpack.c.h.b16 %v1113
    %v1283 = vunpack.c.l.b16 %v1114
    %v1284 = vunpack.c.l.b16 %v1115
    %v1285 = vunpack.c.h.b16 %v1115
    %v1286 = vunpack.c.l.b16 %v1116
    %v1287 = vunpack.c.l.b16 %v1117
    %v1288 = vunpack.c.h.b16 %v1117
    %v1289 = vunpack.c.l.b16 %v1118
    %v1290 = vunpack.c.l.b16 %v1119
    %v1291 = vunpack.c.h.b16 %v1119
    %v1292 = vunpack.c.l.b16 %v1120
    %v1293 = vunpack.c.l.b16 %v1121
    %v1294 = vunpack.c.h.b16 %v1121
    %v1295 = vunpack.c.l.b16 %v1122
    %v1296 = vunpack.c.l.b16 %v1123
    %v1297 = vunpack.c.h.b16 %v1123
    %v1298 = vunpack.c.l.b16 %v1124
    %v1299 = vunpack.c.l.b16 %v1125
    %v1300 = vunpack.c.h.b16 %v1125
    %v1301 = vunpack.c.l.b16 %v1126
    %v1302 = vunpack.c.l.b16 %v1127
    %v1303 = vunpack.c.h.b16 %v1127
    %v1304 = vunpack.c.l.b16 %v1128
    %v1305 = vunpack.c.l.b16 %v1129
    %v1306 = vunpack.c.h.b16 %v1129
    %v1307 = vunpack.c.l.b16 %v1130
    %v1308 = vunpack.c.l.b16 %v1131
    %v1309 = vunpack.c.h.b16 %v1131
    %v1310 = vunpack.c.l.b16 %v1132
    %v1311 = vunpack.c.l.b16 %v1133
    %v1312 = vunpack.c.h.b16 %v1133
    %v1313 = vunpack.c.l.b16 %v1134
    %v1314 = vpack.c.b16 %v1221, %v1218
    %v1315 = vpack.c.b16 %v1222, %v1219
    %v1316 = vpack.c.b16 %v1223, %v1220
    %v1317 = vpack.c.b16 %v1227, %v1224
    %v1318 = vpack.c.b16 %v1228, %v1225
    %v1319 = vpack.c.b16 %v1229, %v1226
    %v1320 = vpack.c.b16 %v1233, %v1230
    %v1321 = vpack.c.b16 %v1234, %v1231
    %v1322 = vpack.c.b16 %v1235, %v1232
    %v1323 = vpack.c.b16 %v1239, %v1236
    %v1324 = vpack.c.b16 %v1240, %v1237
    %v1325 = vpack.c.b16 %v1241, %v1238
    %v1326 = vpack.c.b16 %v1245, %v1242
    %v1327 = vpack.c.b16 %v1246, %v1243
    %v1328 = vpack.c.b16 %v1247, %v1244
    %v1329 = vpack.c.b16 %v1251, %v1248
    %v1330 = vpack.c.b16 %v1252, %v1249
    %v1331 = vpack.c.b16 %v1253, %v1250
    %v1332 = vpack.c.b16 %v1257, %v1254
    %v1333 = vpack.c.b16 %v1258, %v1255
    %v1334 = vpack.c.b16 %v1259, %v1256
    %v1335 = vpack.c.b16 %v1263, %v1260
    %v1336 = vpack.c.b16 %v1264, %v1261
    %v1337 = vpack.c.b16 %v1265, %v1262
    %v1338 = vpack.c.b16 %v1269, %v1266
    %v1339 = vpack.c.b16 %v1270, %v1267
    %v1340 = vpack.c.b16 %v1271, %v1268
    %v1341 = vpack.c.b16 %v1275, %v1272
    %v1342 = vpack.c.b16 %v1276, %v1273
    %v1343 = vpack.c.b16 %v1277, %v1274
    %v1344 = vpack.c.b16 %v1281, %v1278
    %v1345 = vpack.c.b16 %v1282, %v1279
    %v1346 = vpack.c.b16 %v1283, %v1280
    %v1347 = vpack.c.b16 %v1287, %v1284
    %v1348 = vpack.c.b16 %v1288, %v1285
    %v1349 = vpack.c.b16 %v1289, %v1286
    %v1350 = vpack.c.b16 %v1293, %v1290
    %v1351 = vpack.c.b16 %v1294, %v1291
    %v1352 = vpack.c.b16 %v1295, %v1292
    %v1353 = vpack.c.b16 %v1299, %v1296
    %v1354 = vpack.c.b16 %v1300, %v1297
    %v1355 = vpack.c.b16 %v1301, %v1298
    %v1356 = vpack.c.b16 %v1305, %v1302
    %v1357 = vpack.c.b16 %v1306, %v1303
    %v1358 = vpack.c.b16 %v1307, %v1304
    %v1359 = vpack.c.b16 %v1311, %v1308
    %v1360 = vpack.c.b16 %v1312, %v1309
    %v1361 = vpack.c.b16 %v1313, %v1310
    %1410 = vmatprep.subr.bf16.mxu0 %v1315
    %1411 = vmatpush1.bf16.msra.mxu0 %v1314
    %1412 = vmatprep.subr.bf16.mxu0 %v1318
    %1413 = vmatpush1.bf16.msra.mxu0 %v1317
    %1414 = vmatprep.subr.bf16.mxu0 %v1321
    %1415 = vmatpush1.bf16.msra.mxu0 %v1320
    %1416 = vmatprep.subr.bf16.mxu0 %v1324
    %1417 = vmatpush1.bf16.msra.mxu0 %v1323
    %1418 = vmatprep.subr.bf16.mxu0 %v1327
    %1419 = vmatpush1.bf16.msra.mxu0 %v1326
    %1420 = vmatprep.subr.bf16.mxu0 %v1330
    %1421 = vmatpush1.bf16.msra.mxu0 %v1329
    %1422 = vmatprep.subr.bf16.mxu0 %v1333
    %1423 = vmatpush1.bf16.msra.mxu0 %v1332
    %1424 = vmatprep.subr.bf16.mxu0 %v1336
    %1425 = vmatpush1.bf16.msra.mxu0 %v1335
    %1426 = vmatprep.subr.bf16.mxu0 %v1339
    %1427 = vmatpush1.bf16.msra.mxu0 %v1338
    %1428 = vmatprep.subr.bf16.mxu0 %v1342
    %1429 = vmatpush1.bf16.msra.mxu0 %v1341
    %1430 = vmatprep.subr.bf16.mxu0 %v1345
    %1431 = vmatpush1.bf16.msra.mxu0 %v1344
    %1432 = vmatprep.subr.bf16.mxu0 %v1348
    %1433 = vmatpush1.bf16.msra.mxu0 %v1347
    %1434 = vmatprep.subr.bf16.mxu0 %v1351
    %1435 = vmatpush1.bf16.msra.mxu0 %v1350
    %1436 = vmatprep.subr.bf16.mxu0 %v1354
    %1437 = vmatpush1.bf16.msra.mxu0 %v1353
    %1438 = vmatprep.subr.bf16.mxu0 %v1357
    %1439 = vmatpush1.bf16.msra.mxu0 %v1356
    %1440 = vmatprep.subr.bf16.mxu0 %v1360
    %1441 = vmatpush1.bf16.msra.mxu0 %v1359
    %1442 = vmatprep.mubr.bf16.mxu0 %v1137
    %1443 = vmatmul.mubr.bf16.gmra.mrb[0].mxu0 %v1136
    %v1444 = vpop.f32.mrb[0].mxu0
    %v1445 = vadd.f32 %v1142, %v1444
    %v1446 = vpop.f32.mrb[0].mxu0
    %v1447 = vadd.f32 %v1146, %v1446
    %v1448 = vpop.f32.mrb[0].mxu0
    %v1449 = vadd.f32 %v1142, %v1448
    %v1450 = vpop.f32.mrb[0].mxu0
    %v1451 = vadd.f32 %v1146, %v1450
    %1452 = vdwg.mxu0
    %1453 = vmatprep.subr.bf16.mxu0 0
    %1454 = vmatpush1.bf16.msra.mxu0 %v1316
    %1455 = vmatprep.subr.bf16.mxu0 0
    %1456 = vmatpush1.bf16.msra.mxu0 %v1319
    %1457 = vmatprep.subr.bf16.mxu0 0
    %1458 = vmatpush1.bf16.msra.mxu0 %v1322
    %1459 = vmatprep.subr.bf16.mxu0 0
    %1460 = vmatpush1.bf16.msra.mxu0 %v1325
    %1461 = vmatprep.subr.bf16.mxu0 0
    %1462 = vmatpush1.bf16.msra.mxu0 %v1328
    %1463 = vmatprep.subr.bf16.mxu0 0
    %1464 = vmatpush1.bf16.msra.mxu0 %v1331
    %1465 = vmatprep.subr.bf16.mxu0 0
    %1466 = vmatpush1.bf16.msra.mxu0 %v1334
    %1467 = vmatprep.subr.bf16.mxu0 0
    %1468 = vmatpush1.bf16.msra.mxu0 %v1337
    %1469 = vmatprep.subr.bf16.mxu0 0
    %1470 = vmatpush1.bf16.msra.mxu0 %v1340
    %1471 = vmatprep.subr.bf16.mxu0 0
    %1472 = vmatpush1.bf16.msra.mxu0 %v1343
    %1473 = vmatprep.subr.bf16.mxu0 0
    %1474 = vmatpush1.bf16.msra.mxu0 %v1346
    %1475 = vmatprep.subr.bf16.mxu0 0
    %1476 = vmatpush1.bf16.msra.mxu0 %v1349
    %1477 = vmatprep.subr.bf16.mxu0 0
    %1478 = vmatpush1.bf16.msra.mxu0 %v1352
    %1479 = vmatprep.subr.bf16.mxu0 0
    %1480 = vmatpush1.bf16.msra.mxu0 %v1355
    %1481 = vmatprep.subr.bf16.mxu0 0
    %1482 = vmatpush1.bf16.msra.mxu0 %v1358
    %1483 = vmatprep.subr.bf16.mxu0 0
    %1484 = vmatpush1.bf16.msra.mxu0 %v1361
    %1485 = vmatprep.mubr.bf16.mxu0 %v1137
    %1486 = vmatmul.mubr.bf16.gmra.mrb[0].mxu0 %v1136
    %v1487 = vpop.f32.mrb[0].mxu0
    %v1488 = vadd.f32 %v1150, %v1487
    %v1489 = vpop.f32.mrb[0].mxu0
    %v1490 = vpop.f32.mrb[0].mxu0
    %v1491 = vadd.f32 %v1150, %v1490
    %v1492 = vpop.f32.mrb[0].mxu0
    %1493 = vdwg.mxu0
    %v1494 = vld [vmem:[#allocation10 + $0xf] sm:$0x3]
    %v1495 = vld [vmem:[#allocation10 + $0x11] sm:$0x3]
    %v1496 = vadd.f32 %v1445, %v1449
    %v1497 = vrot.slane %v1496, 4
    %v1498 = vadd.f32 %v1496, %v1497
    %v1499 = vrot.slane %v1498, 2
    %v1500 = vadd.f32 %v1498, %v1499
    %v1501 = vrot.slane %v1500, 1
    %v1502 = vadd.f32 %v1500, %v1501
    %v1503 = vadd.f32 %v1447, %v1451
    %v1504 = vrot.slane %v1503, 4
    %v1505 = vadd.f32 %v1503, %v1504
    %v1506 = vrot.slane %v1505, 2
    %v1507 = vadd.f32 %v1505, %v1506
    %v1508 = vrot.slane %v1507, 1
    %v1509 = vadd.f32 %v1507, %v1508
    %v1510 = vmul.f32 %v1445, %v1445
    %v1511 = vmul.f32 %v1447, %v1447
    %v1512 = vmul.f32 %v1449, %v1449
    %v1513 = vmul.f32 %v1451, %v1451
    %v1514 = vadd.f32 %v1510, %v1512
    %v1515 = vrot.slane %v1514, 4
    %v1516 = vadd.f32 %v1514, %v1515
    %v1517 = vrot.slane %v1516, 2
    %v1518 = vadd.f32 %v1516, %v1517
    %v1519 = vrot.slane %v1518, 1
    %v1520 = vadd.f32 %v1518, %v1519
    %v1521 = vadd.f32 %v1511, %v1513
    %v1522 = vrot.slane %v1521, 4
    %v1523 = vadd.f32 %v1521, %v1522
    %v1524 = vrot.slane %v1523, 2
    %v1525 = vadd.f32 %v1523, %v1524
    %v1526 = vrot.slane %v1525, 1
    %v1527 = vadd.f32 %v1525, %v1526
    %v1528 = vmul.f32 %v1502, 0.0625
    %v1529 = vmul.f32 %v1509, 0.0625
    %v1530 = vmul.f32 %v1520, 0.0625
    %v1531 = vmul.f32 %v1527, 0.0625
    %v1532 = vmul.f32 %v1528, %v1528
    %v1533 = vmul.f32 %v1529, %v1529
    %v1534 = vsub.f32 %v1530, %v1532
    %v1535 = vsub.f32 %v1531, %v1533
    %v1536 = vmax.f32 %v1534, 0.0
    %v1537 = vmax.f32 %v1535, 0.0
    %v1538 = vadd.f32 %v1536, 1e-05
    %v1539 = vadd.f32 %v1537, 1e-05
    %v1540 = vrsqrt.pop %v1538
    %v1541 = vrsqrt.pop %v1539
    %v1543 = vlaneseq
    %v1544 = vshrl.u32 %v1543, 7
    %v1545 = vsub.s32 0, %v1544
    %v1546 = vrot.slane %v1494, %v1545
    %v1547 = vlaneseq
    %v1548 = vshrl.u32 %v1547, 7
    %v1549 = vsub.s32 1, %v1548
    %v1550 = vrot.slane %v1494, %v1549
    %v1553 = vmul.f32 %v1540, %v1546
    %v1554 = vmul.f32 %v1541, %v1550
    %v1555 = vlaneseq
    %v1556 = vshrl.u32 %v1555, 7
    %v1557 = vsub.s32 0, %v1556
    %v1558 = vrot.slane %v1553, %v1557
    %v1559 = vlaneseq
    %v1560 = vshrl.u32 %v1559, 7
    %v1561 = vsub.s32 0, %v1560
    %v1562 = vrot.slane %v1554, %v1561
    %v1563 = vmul.f32 %v1445, %v1558
    %v1564 = vmul.f32 %v1447, %v1562
    %v1565 = vmul.f32 %v1449, %v1558
    %v1566 = vmul.f32 %v1451, %v1562
    %v1567 = vmul.f32 %v1528, %v1553
    %v1568 = vmul.f32 %v1529, %v1554
    %v1571 = vcombine.low %v1567, %v1568
    %v1573 = vunpack.c.l.s4 1966171168
    %v1574 = vunpack.c.0.s8 %v1573
    %v1575 = vlaneseq
    %v1576 = vshrl.u32 %v1575, 7
    %v1577 = vsub.s32 %v1574, %v1576
    %v1578 = vrot.slane %v1571, %v1577
    %v1580 = vunpack.c.l.s4 1966171168
    %v1581 = vunpack.c.0.s8 %v1580
    %v1582 = vlaneseq
    %v1583 = vshrl.u32 %v1582, 7
    %v1584 = vsub.s32 %v1581, %v1583
    %v1585 = vrot.slane %v1578, %v1584
    %v1587 = vsub.f32 %v1495, %v1585
    %v1589 = vlaneseq
    %v1590 = vshrl.u32 %v1589, 7
    %v1591 = vsub.s32 0, %v1590
    %v1592 = vrot.slane %v1587, %v1591
    %v1593 = vlaneseq
    %v1594 = vshrl.u32 %v1593, 7
    %v1595 = vsub.s32 1, %v1594
    %v1596 = vrot.slane %v1587, %v1595
    %v1599 = vadd.f32 %v1563, %v1592
    %v1600 = vadd.f32 %v1564, %v1596
    %v1601 = vadd.f32 %v1565, %v1592
    %v1602 = vadd.f32 %v1566, %v1596
    %v1603 = vmax.f32 %v1599, 0.0
    %v1604 = vmax.f32 %v1600, 0.0
    %v1605 = vmax.f32 %v1601, 0.0
    %v1606 = vmax.f32 %v1602, 0.0
    %v1607 = vld [vmem:[#allocation7 + $0x14] sm:$0xf]
    %v1608 = vld [vmem:[#allocation7 + $0x2c] sm:$0xf]
    %v1609 = vld [vmem:[#allocation7 + $0x44] sm:$0xf]
    %v1610 = vld [vmem:[#allocation7 + $0x5c] sm:$0xf]
    %v1611 = vld [vmem:[#allocation7 + $0x74] sm:$0xf]
    %v1612 = vld [vmem:[#allocation7 + $0x8c] sm:$0xf]
    %v1613 = vld [vmem:[#allocation7 + $0xa4] sm:$0xf]
    %v1614 = vld [vmem:[#allocation7 + $0xbc] sm:$0xf]
    %v1615 = vld [vmem:[#allocation7 + $0xd4] sm:$0xf]
    %v1616 = vld [vmem:[#allocation7 + $0xec] sm:$0xf]
    %v1617 = vld [vmem:[#allocation7 + $0x104] sm:$0xf]
    %v1618 = vld [vmem:[#allocation7 + $0x11c] sm:$0xf]
    %v1619 = vld [vmem:[#allocation7 + $0x134] sm:$0xf]
    %v1620 = vld [vmem:[#allocation7 + $0x14c] sm:$0xf]
    %v1621 = vld [vmem:[#allocation7 + $0x164] sm:$0xf]
    %v1622 = vld [vmem:[#allocation7 + $0x17c] sm:$0xf]
    %v1623 = vld [vmem:[#allocation7 + $0x194] sm:$0xf]
    %v1624 = vld [vmem:[#allocation7 + $0x1ac] sm:$0xf]
    %v1625 = vld [vmem:[#allocation7 + $0x1c4] sm:$0xf]
    %v1626 = vld [vmem:[#allocation7 + $0x1dc] sm:$0xf]
    %v1627 = vld [vmem:[#allocation7 + $0x1f4] sm:$0xf]
    %v1628 = vld [vmem:[#allocation7 + $0x20c] sm:$0xf]
    %v1629 = vld [vmem:[#allocation7 + $0x224] sm:$0xf]
    %v1630 = vld [vmem:[#allocation7 + $0x23c] sm:$0xf]
    %v1631 = vld [vmem:[#allocation7 + $0x254] sm:$0xf]
    %v1632 = vld [vmem:[#allocation7 + $0x26c] sm:$0xf]
    %v1633 = vld [vmem:[#allocation7 + $0x284] sm:$0xf]
    %v1634 = vld [vmem:[#allocation7 + $0x29c] sm:$0xf]
    %v1635 = vld [vmem:[#allocation7 + $0x2b4] sm:$0xf]
    %v1636 = vld [vmem:[#allocation7 + $0x2cc] sm:$0xf]
    %v1637 = vld [vmem:[#allocation7 + $0x2e4] sm:$0xf]
    %v1638 = vld [vmem:[#allocation7 + $0x2fc] sm:$0xf]
    %v1639 = vld [vmem:[#allocation10 + $0x13] sm:$0x1]
    %v1640 = vpack.c.bf16 %v1605, %v1603
    %v1641 = vpack.c.bf16 %v1606, %v1604
    %v1643 = vlaneseq
    %v1644 = vshrl.u32 %v1643, 7
    %v1645 = vsub.s32 0, %v1644
    %v1646 = vrot.slane %v1639, %v1645
    %v1680 = vunpack.c.l.b16 %v1607
    %v1681 = vunpack.c.l.b16 %v1608
    %v1682 = vunpack.c.l.b16 %v1609
    %v1683 = vunpack.c.l.b16 %v1610
    %v1684 = vunpack.c.l.b16 %v1611
    %v1685 = vunpack.c.l.b16 %v1612
    %v1686 = vunpack.c.l.b16 %v1613
    %v1687 = vunpack.c.l.b16 %v1614
    %v1688 = vunpack.c.l.b16 %v1615
    %v1689 = vunpack.c.l.b16 %v1616
    %v1690 = vunpack.c.l.b16 %v1617
    %v1691 = vunpack.c.l.b16 %v1618
    %v1692 = vunpack.c.l.b16 %v1619
    %v1693 = vunpack.c.l.b16 %v1620
    %v1694 = vunpack.c.l.b16 %v1621
    %v1695 = vunpack.c.l.b16 %v1622
    %v1696 = vunpack.c.l.b16 %v1623
    %v1697 = vunpack.c.l.b16 %v1624
    %v1698 = vunpack.c.l.b16 %v1625
    %v1699 = vunpack.c.l.b16 %v1626
    %v1700 = vunpack.c.l.b16 %v1627
    %v1701 = vunpack.c.l.b16 %v1628
    %v1702 = vunpack.c.l.b16 %v1629
    %v1703 = vunpack.c.l.b16 %v1630
    %v1704 = vunpack.c.l.b16 %v1631
    %v1705 = vunpack.c.l.b16 %v1632
    %v1706 = vunpack.c.l.b16 %v1633
    %v1707 = vunpack.c.l.b16 %v1634
    %v1708 = vunpack.c.l.b16 %v1635
    %v1709 = vunpack.c.l.b16 %v1636
    %v1710 = vunpack.c.l.b16 %v1637
    %v1711 = vunpack.c.l.b16 %v1638
    %v1712 = vpack.c.b16 %v1681, %v1680
    %v1713 = vpack.c.b16 %v1683, %v1682
    %v1714 = vpack.c.b16 %v1685, %v1684
    %v1715 = vpack.c.b16 %v1687, %v1686
    %v1716 = vpack.c.b16 %v1689, %v1688
    %v1717 = vpack.c.b16 %v1691, %v1690
    %v1718 = vpack.c.b16 %v1693, %v1692
    %v1719 = vpack.c.b16 %v1695, %v1694
    %v1720 = vpack.c.b16 %v1697, %v1696
    %v1721 = vpack.c.b16 %v1699, %v1698
    %v1722 = vpack.c.b16 %v1701, %v1700
    %v1723 = vpack.c.b16 %v1703, %v1702
    %v1724 = vpack.c.b16 %v1705, %v1704
    %v1725 = vpack.c.b16 %v1707, %v1706
    %v1726 = vpack.c.b16 %v1709, %v1708
    %v1727 = vpack.c.b16 %v1711, %v1710
    %1744 = vmatprep.subr.bf16.mxu0 0
    %1745 = vmatpush1.bf16.msra.mxu0 %v1712
    %1746 = vmatprep.subr.bf16.mxu0 0
    %1747 = vmatpush1.bf16.msra.mxu0 %v1713
    %1748 = vmatprep.subr.bf16.mxu0 0
    %1749 = vmatpush1.bf16.msra.mxu0 %v1714
    %1750 = vmatprep.subr.bf16.mxu0 0
    %1751 = vmatpush1.bf16.msra.mxu0 %v1715
    %1752 = vmatprep.subr.bf16.mxu0 0
    %1753 = vmatpush1.bf16.msra.mxu0 %v1716
    %1754 = vmatprep.subr.bf16.mxu0 0
    %1755 = vmatpush1.bf16.msra.mxu0 %v1717
    %1756 = vmatprep.subr.bf16.mxu0 0
    %1757 = vmatpush1.bf16.msra.mxu0 %v1718
    %1758 = vmatprep.subr.bf16.mxu0 0
    %1759 = vmatpush1.bf16.msra.mxu0 %v1719
    %1760 = vmatprep.subr.bf16.mxu0 0
    %1761 = vmatpush1.bf16.msra.mxu0 %v1720
    %1762 = vmatprep.subr.bf16.mxu0 0
    %1763 = vmatpush1.bf16.msra.mxu0 %v1721
    %1764 = vmatprep.subr.bf16.mxu0 0
    %1765 = vmatpush1.bf16.msra.mxu0 %v1722
    %1766 = vmatprep.subr.bf16.mxu0 0
    %1767 = vmatpush1.bf16.msra.mxu0 %v1723
    %1768 = vmatprep.subr.bf16.mxu0 0
    %1769 = vmatpush1.bf16.msra.mxu0 %v1724
    %1770 = vmatprep.subr.bf16.mxu0 0
    %1771 = vmatpush1.bf16.msra.mxu0 %v1725
    %1772 = vmatprep.subr.bf16.mxu0 0
    %1773 = vmatpush1.bf16.msra.mxu0 %v1726
    %1774 = vmatprep.subr.bf16.mxu0 0
    %1775 = vmatpush1.bf16.msra.mxu0 %v1727
    %1776 = vmatprep.mubr.bf16.mxu0 %v1641
    %1777 = vmatmul.mubr.bf16.gmra.mrb[0].mxu0 %v1640
    %v1778 = vpop.f32.mrb[0].mxu0
    %v1779 = vadd.f32 %v1646, %v1778
    %v1780 = vpop.f32.mrb[0].mxu0
    %v1781 = vpop.f32.mrb[0].mxu0
    %v1782 = vadd.f32 %v1646, %v1781
    %v1783 = vpop.f32.mrb[0].mxu0
    %1784 = vdwg.mxu0
    %v1785 = vld [vmem:[#allocation10 + $0x14] sm:$0x1]
    %v1786 = vld [vmem:[#allocation10 + $0x15] sm:$0x1]
    %v1787 = vadd.f32 %v1779, %v1782
    %v1788 = vrot.slane %v1787, 4
    %v1789 = vadd.f32 %v1787, %v1788
    %v1790 = vrot.slane %v1789, 2
    %v1791 = vadd.f32 %v1789, %v1790
    %v1792 = vrot.slane %v1791, 1
    %v1793 = vadd.f32 %v1791, %v1792
    %v1794 = vmul.f32 %v1779, %v1779
    %v1795 = vmul.f32 %v1782, %v1782
    %v1796 = vadd.f32 %v1794, %v1795
    %v1797 = vrot.slane %v1796, 4
    %v1798 = vadd.f32 %v1796, %v1797
    %v1799 = vrot.slane %v1798, 2
    %v1800 = vadd.f32 %v1798, %v1799
    %v1801 = vrot.slane %v1800, 1
    %v1802 = vadd.f32 %v1800, %v1801
    %v1803 = vmul.f32 %v1793, 0.0625
    %v1804 = vmul.f32 %v1802, 0.0625
    %v1805 = vmul.f32 %v1803, %v1803
    %v1806 = vsub.f32 %v1804, %v1805
    %v1807 = vmax.f32 %v1806, 0.0
    %v1808 = vadd.f32 %v1807, 1e-05
    %v1809 = vrsqrt.pop %v1808
    %v1810 = vmul.f32 %v1809, %v1785
    %v1811 = vlaneseq
    %v1812 = vshrl.u32 %v1811, 7
    %v1813 = vsub.s32 0, %v1812
    %v1814 = vrot.slane %v1810, %v1813
    %v1815 = vmul.f32 %v1779, %v1814
    %v1816 = vmul.f32 %v1782, %v1814
    %v1817 = vmul.f32 %v1803, %v1810
    %v1818 = vsub.f32 %v1786, %v1817
    %v1820 = vlaneseq
    %v1821 = vshrl.u32 %v1820, 7
    %v1822 = vsub.s32 0, %v1821
    %v1823 = vrot.slane %v1818, %v1822
    %v1825 = vadd.f32 %v1815, %v1823
    %v1826 = vadd.f32 %v1816, %v1823
    %v1827 = vmax.f32 %v1825, 0.0
    %v1828 = vmax.f32 %v1826, 0.0
    %v1829 = vmax.f32 %v1488, 0.0
    %v1830 = vmax.f32 %v1491, 0.0
    %v1831 = vld [vmem:[#allocation10 + $0x16] sm:$0x1]
    %v1832 = vld [vmem:[#allocation10 + $0x17] sm:$0x1]
    %v1833 = vadd.f32 %v1829, %v1830
    %v1834 = vrot.slane %v1833, 4
    %v1835 = vadd.f32 %v1833, %v1834
    %v1836 = vrot.slane %v1835, 2
    %v1837 = vadd.f32 %v1835, %v1836
    %v1838 = vrot.slane %v1837, 1
    %v1839 = vadd.f32 %v1837, %v1838
    %v1840 = vmul.f32 %v1829, %v1829
    %v1841 = vmul.f32 %v1830, %v1830
    %v1842 = vadd.f32 %v1840, %v1841
    %v1843 = vrot.slane %v1842, 4
    %v1844 = vadd.f32 %v1842, %v1843
    %v1845 = vrot.slane %v1844, 2
    %v1846 = vadd.f32 %v1844, %v1845
    %v1847 = vrot.slane %v1846, 1
    %v1848 = vadd.f32 %v1846, %v1847
    %v1849 = vmul.f32 %v1839, 0.0625
    %v1850 = vmul.f32 %v1848, 0.0625
    %v1851 = vmul.f32 %v1849, %v1849
    %v1852 = vsub.f32 %v1850, %v1851
    %v1853 = vmax.f32 %v1852, 0.0
    %v1854 = vadd.f32 %v1853, 1e-05
    %v1855 = vrsqrt.pop %v1854
    %v1856 = vmul.f32 %v1855, %v1831
    %v1857 = vlaneseq
    %v1858 = vshrl.u32 %v1857, 7
    %v1859 = vsub.s32 0, %v1858
    %v1860 = vrot.slane %v1856, %v1859
    %v1861 = vmul.f32 %v1829, %v1860
    %v1862 = vmul.f32 %v1830, %v1860
    %v1863 = vmul.f32 %v1849, %v1856
    %v1864 = vsub.f32 %v1832, %v1863
    %v1866 = vlaneseq
    %v1867 = vshrl.u32 %v1866, 7
    %v1868 = vsub.s32 0, %v1867
    %v1869 = vrot.slane %v1864, %v1868
    %v1871 = vadd.f32 %v1861, %v1869
    %v1872 = vadd.f32 %v1862, %v1869
    %v1873 = vld [vmem:[#allocation8] sm:$0xff]
    %v1874 = vld [vmem:[#allocation8 + $0x8] sm:$0xff]
    %v1875 = vld [vmem:[#allocation8 + $0x10] sm:$0xff]
    %v1876 = vld [vmem:[#allocation8 + $0x18] sm:$0xff]
    %v1877 = vld [vmem:[#allocation8 + $0x20] sm:$0xff]
    %v1878 = vld [vmem:[#allocation8 + $0x28] sm:$0xff]
    %v1879 = vld [vmem:[#allocation8 + $0x30] sm:$0xff]
    %v1880 = vld [vmem:[#allocation8 + $0x38] sm:$0xff]
    %v1881 = vld [vmem:[#allocation8 + $0x40] sm:$0xff]
    %v1882 = vld [vmem:[#allocation8 + $0x48] sm:$0xff]
    %v1883 = vld [vmem:[#allocation8 + $0x50] sm:$0xff]
    %v1884 = vld [vmem:[#allocation8 + $0x58] sm:$0xff]
    %v1885 = vld [vmem:[#allocation8 + $0x60] sm:$0xff]
    %v1886 = vld [vmem:[#allocation8 + $0x68] sm:$0xff]
    %v1887 = vld [vmem:[#allocation8 + $0x70] sm:$0xff]
    %v1888 = vld [vmem:[#allocation8 + $0x78] sm:$0xff]
    %v1889 = vld [vmem:[#allocation8 + $0x80] sm:$0xff]
    %v1890 = vld [vmem:[#allocation8 + $0x88] sm:$0xff]
    %v1891 = vld [vmem:[#allocation8 + $0x90] sm:$0xff]
    %v1892 = vld [vmem:[#allocation8 + $0x98] sm:$0xff]
    %v1893 = vld [vmem:[#allocation8 + $0xa0] sm:$0xff]
    %v1894 = vld [vmem:[#allocation8 + $0xa8] sm:$0xff]
    %v1895 = vld [vmem:[#allocation8 + $0xb0] sm:$0xff]
    %v1896 = vld [vmem:[#allocation8 + $0xb8] sm:$0xff]
    %v1897 = vld [vmem:[#allocation8 + $0xc0] sm:$0xff]
    %v1898 = vld [vmem:[#allocation8 + $0xc8] sm:$0xff]
    %v1899 = vld [vmem:[#allocation8 + $0xd0] sm:$0xff]
    %v1900 = vld [vmem:[#allocation8 + $0xd8] sm:$0xff]
    %v1901 = vld [vmem:[#allocation8 + $0xe0] sm:$0xff]
    %v1902 = vld [vmem:[#allocation8 + $0xe8] sm:$0xff]
    %v1903 = vld [vmem:[#allocation8 + $0xf0] sm:$0xff]
    %v1904 = vld [vmem:[#allocation8 + $0xf8] sm:$0xff]
    %v1905 = vld [vmem:[#allocation10 + $0x18] sm:$0x3]
    %v1906 = vpack.c.bf16 %v1828, %v1827
    %v1907 = vpack.c.bf16 %v1872, %v1871
    %v1909 = vlaneseq
    %v1910 = vshrl.u32 %v1909, 7
    %v1911 = vsub.s32 0, %v1910
    %v1912 = vrot.slane %v1905, %v1911
    %v1913 = vlaneseq
    %v1914 = vshrl.u32 %v1913, 7
    %v1915 = vsub.s32 1, %v1914
    %v1916 = vrot.slane %v1905, %v1915
    %v1951 = vunpack.c.l.b16 %v1873
    %v1952 = vunpack.c.h.b16 %v1873
    %v1953 = vunpack.c.l.b16 %v1874
    %v1954 = vunpack.c.h.b16 %v1874
    %v1955 = vunpack.c.l.b16 %v1875
    %v1956 = vunpack.c.h.b16 %v1875
    %v1957 = vunpack.c.l.b16 %v1876
    %v1958 = vunpack.c.h.b16 %v1876
    %v1959 = vunpack.c.l.b16 %v1877
    %v1960 = vunpack.c.h.b16 %v1877
    %v1961 = vunpack.c.l.b16 %v1878
    %v1962 = vunpack.c.h.b16 %v1878
    %v1963 = vunpack.c.l.b16 %v1879
    %v1964 = vunpack.c.h.b16 %v1879
    %v1965 = vunpack.c.l.b16 %v1880
    %v1966 = vunpack.c.h.b16 %v1880
    %v1967 = vunpack.c.l.b16 %v1881
    %v1968 = vunpack.c.h.b16 %v1881
    %v1969 = vunpack.c.l.b16 %v1882
    %v1970 = vunpack.c.h.b16 %v1882
    %v1971 = vunpack.c.l.b16 %v1883
    %v1972 = vunpack.c.h.b16 %v1883
    %v1973 = vunpack.c.l.b16 %v1884
    %v1974 = vunpack.c.h.b16 %v1884
    %v1975 = vunpack.c.l.b16 %v1885
    %v1976 = vunpack.c.h.b16 %v1885
    %v1977 = vunpack.c.l.b16 %v1886
    %v1978 = vunpack.c.h.b16 %v1886
    %v1979 = vunpack.c.l.b16 %v1887
    %v1980 = vunpack.c.h.b16 %v1887
    %v1981 = vunpack.c.l.b16 %v1888
    %v1982 = vunpack.c.h.b16 %v1888
    %v1983 = vunpack.c.l.b16 %v1889
    %v1984 = vunpack.c.h.b16 %v1889
    %v1985 = vunpack.c.l.b16 %v1890
    %v1986 = vunpack.c.h.b16 %v1890
    %v1987 = vunpack.c.l.b16 %v1891
    %v1988 = vunpack.c.h.b16 %v1891
    %v1989 = vunpack.c.l.b16 %v1892
    %v1990 = vunpack.c.h.b16 %v1892
    %v1991 = vunpack.c.l.b16 %v1893
    %v1992 = vunpack.c.h.b16 %v1893
    %v1993 = vunpack.c.l.b16 %v1894
    %v1994 = vunpack.c.h.b16 %v1894
    %v1995 = vunpack.c.l.b16 %v1895
    %v1996 = vunpack.c.h.b16 %v1895
    %v1997 = vunpack.c.l.b16 %v1896
    %v1998 = vunpack.c.h.b16 %v1896
    %v1999 = vunpack.c.l.b16 %v1897
    %v2000 = vunpack.c.h.b16 %v1897
    %v2001 = vunpack.c.l.b16 %v1898
    %v2002 = vunpack.c.h.b16 %v1898
    %v2003 = vunpack.c.l.b16 %v1899
    %v2004 = vunpack.c.h.b16 %v1899
    %v2005 = vunpack.c.l.b16 %v1900
    %v2006 = vunpack.c.h.b16 %v1900
    %v2007 = vunpack.c.l.b16 %v1901
    %v2008 = vunpack.c.h.b16 %v1901
    %v2009 = vunpack.c.l.b16 %v1902
    %v2010 = vunpack.c.h.b16 %v1902
    %v2011 = vunpack.c.l.b16 %v1903
    %v2012 = vunpack.c.h.b16 %v1903
    %v2013 = vunpack.c.l.b16 %v1904
    %v2014 = vunpack.c.h.b16 %v1904
    %v2015 = vpack.c.b16 %v1953, %v1951
    %v2016 = vpack.c.b16 %v1954, %v1952
    %v2017 = vpack.c.b16 %v1957, %v1955
    %v2018 = vpack.c.b16 %v1958, %v1956
    %v2019 = vpack.c.b16 %v1961, %v1959
    %v2020 = vpack.c.b16 %v1962, %v1960
    %v2021 = vpack.c.b16 %v1965, %v1963
    %v2022 = vpack.c.b16 %v1966, %v1964
    %v2023 = vpack.c.b16 %v1969, %v1967
    %v2024 = vpack.c.b16 %v1970, %v1968
    %v2025 = vpack.c.b16 %v1973, %v1971
    %v2026 = vpack.c.b16 %v1974, %v1972
    %v2027 = vpack.c.b16 %v1977, %v1975
    %v2028 = vpack.c.b16 %v1978, %v1976
    %v2029 = vpack.c.b16 %v1981, %v1979
    %v2030 = vpack.c.b16 %v1982, %v1980
    %v2031 = vpack.c.b16 %v1985, %v1983
    %v2032 = vpack.c.b16 %v1986, %v1984
    %v2033 = vpack.c.b16 %v1989, %v1987
    %v2034 = vpack.c.b16 %v1990, %v1988
    %v2035 = vpack.c.b16 %v1993, %v1991
    %v2036 = vpack.c.b16 %v1994, %v1992
    %v2037 = vpack.c.b16 %v1997, %v1995
    %v2038 = vpack.c.b16 %v1998, %v1996
    %v2039 = vpack.c.b16 %v2001, %v1999
    %v2040 = vpack.c.b16 %v2002, %v2000
    %v2041 = vpack.c.b16 %v2005, %v2003
    %v2042 = vpack.c.b16 %v2006, %v2004
    %v2043 = vpack.c.b16 %v2009, %v2007
    %v2044 = vpack.c.b16 %v2010, %v2008
    %v2045 = vpack.c.b16 %v2013, %v2011
    %v2046 = vpack.c.b16 %v2014, %v2012
    %2079 = vmatprep.subr.bf16.mxu0 %v2016
    %2080 = vmatpush1.bf16.msra.mxu0 %v2015
    %2081 = vmatprep.subr.bf16.mxu0 %v2018
    %2082 = vmatpush1.bf16.msra.mxu0 %v2017
    %2083 = vmatprep.subr.bf16.mxu0 %v2020
    %2084 = vmatpush1.bf16.msra.mxu0 %v2019
    %2085 = vmatprep.subr.bf16.mxu0 %v2022
    %2086 = vmatpush1.bf16.msra.mxu0 %v2021
    %2087 = vmatprep.subr.bf16.mxu0 %v2024
    %2088 = vmatpush1.bf16.msra.mxu0 %v2023
    %2089 = vmatprep.subr.bf16.mxu0 %v2026
    %2090 = vmatpush1.bf16.msra.mxu0 %v2025
    %2091 = vmatprep.subr.bf16.mxu0 %v2028
    %2092 = vmatpush1.bf16.msra.mxu0 %v2027
    %2093 = vmatprep.subr.bf16.mxu0 %v2030
    %2094 = vmatpush1.bf16.msra.mxu0 %v2029
    %2095 = vmatprep.subr.bf16.mxu0 %v2032
    %2096 = vmatpush1.bf16.msra.mxu0 %v2031
    %2097 = vmatprep.subr.bf16.mxu0 %v2034
    %2098 = vmatpush1.bf16.msra.mxu0 %v2033
    %2099 = vmatprep.subr.bf16.mxu0 %v2036
    %2100 = vmatpush1.bf16.msra.mxu0 %v2035
    %2101 = vmatprep.subr.bf16.mxu0 %v2038
    %2102 = vmatpush1.bf16.msra.mxu0 %v2037
    %2103 = vmatprep.subr.bf16.mxu0 %v2040
    %2104 = vmatpush1.bf16.msra.mxu0 %v2039
    %2105 = vmatprep.subr.bf16.mxu0 %v2042
    %2106 = vmatpush1.bf16.msra.mxu0 %v2041
    %2107 = vmatprep.subr.bf16.mxu0 %v2044
    %2108 = vmatpush1.bf16.msra.mxu0 %v2043
    %2109 = vmatprep.subr.bf16.mxu0 %v2046
    %2110 = vmatpush1.bf16.msra.mxu0 %v2045
    %2111 = vmatprep.mubr.bf16.mxu0 %v1907
    %2112 = vmatmul.mubr.bf16.gmra.mrb[0].mxu0 %v1906
    %v2113 = vpop.f32.mrb[0].mxu0
    %v2114 = vadd.f32 %v1912, %v2113
    %v2115 = vpop.f32.mrb[0].mxu0
    %v2116 = vadd.f32 %v1916, %v2115
    %v2117 = vpop.f32.mrb[0].mxu0
    %v2118 = vadd.f32 %v1912, %v2117
    %v2119 = vpop.f32.mrb[0].mxu0
    %v2120 = vadd.f32 %v1916, %v2119
    %2121 = vdwg.mxu0
    %2122 = vst [vmem:[%s5] sm:$0xff] %v2114
    %2123 = vst [vmem:[%s5 + $0x8] sm:$0xff] %v2118
    %v2124 = vsub.f32 0.0, %v2116
    %v2125 = vsub.f32 0.0, %v2120
    %v2126 = vmax.f32 %v2124, 0.0
    %v2127 = vmax.f32 %v2125, 0.0
    %v2128 = vand.u32 2147483647, %v2124
    %v2129 = vand.u32 2147483647, %v2125
    %v2130 = vsub.f32 0.0, %v2128
    %v2131 = vsub.f32 0.0, %v2129
    %v2132 = vmul.f32 %v2130, 1.442695
    %v2133 = vpow.pop %v2132
    %v2134 = vmul.f32 %v2131, 1.442695
    %v2135 = vpow.pop %v2134
    %v2136 = vadd.f32 %v2133, 1.0
    %v2137 = vlog2.pop %v2136
    %v2138 = vmul.f32 %v2137, 0.6931472
    %v2139 = vmul.f32 -0.5, %v2133
    %v2140 = vadd.f32 %v2139, 1.0
    %v2141 = vmul.f32 %v2140, %v2133
    %v2142 = vand.u32 2147483647, %v2133
    %vm2143 = vcmp.lt.f32.partialorder %v2142, 0.0004427343
    %v2144 = vsel %vm2143, %v2141, %v2138
    %v2145 = vadd.f32 %v2135, 1.0
    %v2146 = vlog2.pop %v2145
    %v2147 = vmul.f32 %v2146, 0.6931472
    %v2148 = vmul.f32 -0.5, %v2135
    %v2149 = vadd.f32 %v2148, 1.0
    %v2150 = vmul.f32 %v2149, %v2135
    %v2151 = vand.u32 2147483647, %v2135
    %vm2152 = vcmp.lt.f32.partialorder %v2151, 0.0004427343
    %v2153 = vsel %vm2152, %v2150, %v2147
    %v2154 = vadd.f32 %v2126, %v2144
    %v2155 = vadd.f32 %v2127, %v2153
    %v2156 = vmin.f32 %v2154, 100.0
    %v2157 = vmin.f32 %v2155, 100.0
    %vm2158 = vcmask 7168
    %v2159 = vsel %vm2158, %v2156, 0.0
    %v2160 = vsel %vm2158, %v2157, 0.0
    %v2161 = vadd.f32 %v2159, %v2160
    %2162 = vadd.xlane.f32.xlu0 %v2161
    %v2163 = vpop.xlane.xlu0 %2162
    %v2164 = vrot.slane %v2163, 4
    %v2165 = vadd.f32 %v2163, %v2164
    %v2166 = vrot.slane %v2165, 2
    %v2167 = vadd.f32 %v2165, %v2166
    %v2168 = vrot.slane %v2167, 1
    %v2169 = vadd.f32 %v2167, %v2168
    %s2170 = vtos %v2169
    %v2171 = vrcp.pop 16.0
    %s2172 = vtos %v2171
    %s2173 = smul.f32 %s2170, %s2172
    %v2174 = vstv %s2173
    %vm2175 = vcmask 0
    %2176 = vst.msk [vmem:[#allocation11] sm:$0x1] %vm2175, %v2174
    // Predicated region
    $region42: #{dann_mlp_forward.1} parent=1 // pred_check
      _
    $region43: #{dann_mlp_forward.1} parent=1 // pred_check_branch
      %2178 = sbr.rel (0) target = $region45
    $region44: #{dann_mlp_forward.1} parent=1 // pred_region
      _
    $region45: #{dann_mlp_forward.1} parent=1 // pred_fallthru
      _
    // Predicated region
    $region46: #{dann_mlp_forward.1} parent=1 // pred_check
      _
    $region47: #{dann_mlp_forward.1} parent=1 // pred_check_branch
      %2180 = sbr.rel (0) target = $region49
    $region48: #{dann_mlp_forward.1} parent=1 // pred_region
      %s2182 = ssub.s32 16, 16
      %2183 = vsyncadd [#allocation4], %s2182
      %s2185 = sshll.u32 [#allocation11], 4
      %s2186 = int_to_ptr.vmem [resolvable:$true] %s2185
      %2188 = dma.vmem_to_hbm [thread:$0]  %s2186, 16, %s6, [#allocation4]
    $region49: #{dann_mlp_forward.1} parent=1 // pred_fallthru
      _
    // Predicated region
    $region50: #{dann_mlp_forward.1} parent=1 // pred_check
      _
    $region51: #{dann_mlp_forward.1} parent=1 // pred_check_branch
      %2190 = sbr.rel (0) target = $region53
    $region52: #{dann_mlp_forward.1} parent=1 // pred_region
      _
    $region53: #{dann_mlp_forward.1} parent=1 // pred_fallthru
      _
    // Predicated region
    $region54: #{dann_mlp_forward.1} parent=1 // pred_check
      _
    $region55: #{dann_mlp_forward.1} parent=1 // pred_check_branch
      %2192 = sbr.rel (0) target = $region57
    $region56: #{dann_mlp_forward.1} parent=1 // pred_region
      %2193 = dma.done [#allocation4], 16
    $region57: #{dann_mlp_forward.1} parent=1 // pred_fallthru
      _
    %2194 = vsyncpa [#allocation3], 1
    %2195 = vsyncpa [#allocation6], 1
    %2196 = vsyncpa [#allocation9], 1
    %2197 = vsyncpa [#allocation4], 1

</llo_original>
